<compile_context>
chip_gen: v7x
topology: tpu7x:2x2x1
jax: 0.10.0
libtpu: 0.0.40
codegen_flags: <defaults>
</compile_context>

<pallas_src>
import jax
import jax.numpy as jnp
from jax.experimental import pallas as pl
from jax.experimental.pallas import tpu as pltpu

BN_EPS = 1e-3  # BatchNorm2d(eps=0.001)


def _se_conv_bn_kernel(se_ref, w1_ref, b1_ref, x_ref, w2_ref,
                       gamma_ref, beta_ref, o_ref, sum_ref):
    k = pl.program_id(0)
    last = pl.num_programs(0) - 1

    # --- SE gate slice for this K tile (conv2d51 + sigmoid), VPU/XLU only ---
    # w1_ref[0]: (C_se, TK), se_ref: (C_se, 1)  ->  logits (1, TK)
    logits = jnp.sum(w1_ref[0] * se_ref[...], axis=0, keepdims=True) + b1_ref[0]
    gate = 1.0 / (1.0 + jnp.exp(-logits))                      # (1, TK)

    # --- fold gate into projection weights, then one streaming MXU matmul ---
    w2g = w2_ref[0] * gate                                     # (72, TK) f32
    y_part = jnp.dot(w2g.astype(x_ref.dtype), x_ref[...],
                     preferred_element_type=jnp.float32)       # (72, P) f32
    # Partial column sums for the BN mean: taken from the just-produced partial
    # product, so the epilogue never traverses the resident block for the sum.
    part_sum = jnp.sum(y_part, axis=1, keepdims=True)          # (72, 1)

    # Accumulate directly into the resident f32 output block.
    @pl.when(k == 0)
    def _():
        o_ref[...] = y_part
        sum_ref[...] = part_sum

    @pl.when(k != 0)
    def _():
        o_ref[...] = o_ref[...] + y_part
        sum_ref[...] = sum_ref[...] + part_sum

    # --- BatchNorm (training-mode batch stats) epilogue, fused scale/shift ---
    @pl.when(k == last)
    def _():
        y = o_ref[...]                                         # (72, P)
        inv_p = 1.0 / y.shape[1]
        mean = sum_ref[...] * inv_p                            # (72, 1)
        # One-pass variance (E[y^2]-mean^2); fine in f32 at these magnitudes.
        var = jnp.sum(y * y, axis=1, keepdims=True) * inv_p - mean * mean
        scale = gamma_ref[...] * jax.lax.rsqrt(var + BN_EPS)   # (72, 1)
        shift = beta_ref[...] - scale * mean                   # (72, 1)
        o_ref[...] = y * scale + shift


def se_conv_bn(x154, x157, w1, b1, w2, gamma, beta, *,
               k_tiles=2, matmul_dtype=jnp.float32):
    """x154: (1, C_mid, H, W) NCHW, x157: (1, C_se, 1, 1) NCHW.

    k_tiles: reduction-axis tiling; sweep {1,2,3}.  Use 1 on v7x.
    matmul_dtype: jnp.bfloat16 halves the x HBM stream and MXU passes (main
      win on v5e); gate/BN math stays f32.  Ideally the upstream producer
      already emits x in bf16 so the wrapper cast is free.
    """
    N, C_mid, H, W = x154.shape
    assert N == 1, "kernel assumes batch 1 (as in the reference module)"
    C_se = x157.shape[1]
    C_out = w2.shape[0]
    P = H * W
    assert C_mid % k_tiles == 0
    TK = C_mid // k_tiles
    assert TK % 8 == 0, "K tile must be sublane-aligned"

    # Free reshapes (NCHW, N=1): feature map -> (C_mid, P), SE vector -> column.
    x_cp = x154.reshape(C_mid, P).astype(matmul_dtype)
    se_col = x157.reshape(C_se, 1).astype(jnp.float32)

    # One-time tiny weight repacks into K-tiled layouts (no in-kernel transposes).
    w1_t = jnp.transpose(w1.reshape(k_tiles, TK, C_se), (0, 2, 1))    # (kt, 18, TK)
    b1_t = b1.reshape(k_tiles, 1, TK)                                 # (kt, 1, TK)
    w2_t = jnp.transpose(w2.reshape(C_out, k_tiles, TK), (1, 0, 2))   # (kt, 72, TK)
    gamma_col = gamma.reshape(C_out, 1)
    beta_col = beta.reshape(C_out, 1)

    # Advisory cost so XLA schedules neighbouring ops/DMAs around this tiny call.
    flops = 2 * C_out * C_mid * P + 2 * C_mid * C_se
    bytes_accessed = (x_cp.size * x_cp.dtype.itemsize        # x stream
                      + C_out * P * 4                        # output
                      + (w2.size + w1.size + b1.size + 2 * C_out + C_se) * 4)
    cost = pl.CostEstimate(flops=flops, transcendentals=C_mid,
                           bytes_accessed=bytes_accessed)

    out_cp = pl.pallas_call(
        _se_conv_bn_kernel,
        out_shape=jax.ShapeDtypeStruct((C_out, P), jnp.float32),
        grid=(k_tiles,),
        in_specs=[
            pl.BlockSpec((C_se, 1), lambda k: (0, 0)),         # se column
            pl.BlockSpec((1, C_se, TK), lambda k: (k, 0, 0)),  # w1 K-tile
            pl.BlockSpec((1, 1, TK), lambda k: (k, 0, 0)),     # b1 K-tile
            pl.BlockSpec((TK, P), lambda k: (k, 0)),           # x K-tile (streamed)
            pl.BlockSpec((1, C_out, TK), lambda k: (k, 0, 0)), # w2 K-tile
            pl.BlockSpec((C_out, 1), lambda k: (0, 0)),        # gamma
            pl.BlockSpec((C_out, 1), lambda k: (0, 0)),        # beta
        ],
        out_specs=pl.BlockSpec((C_out, P), lambda k: (0, 0)),  # resident accumulator
        scratch_shapes=[pltpu.VMEM((C_out, 1), jnp.float32)],  # running column sums
        compiler_params=pltpu.CompilerParams(
            dimension_semantics=("arbitrary",)),
        cost_estimate=cost,
    )(se_col, w1_t, b1_t, x_cp, w2_t, gamma_col, beta_col)

    # (C_out, P) -> NCHW, free reshape.
    return out_cp.reshape(N, C_out, H, W)


def _reference(x154, x157, w1, b1, w2, gamma, beta):
    """Plain-JAX reference of the PyTorch forward (training-mode BN)."""
    se = x157.reshape(1, -1)                                           # (1,18)
    gate = jax.nn.sigmoid(se @ w1.reshape(w1.shape[0], -1).T + b1)     # (1,432)
    xg = x154 * gate.reshape(1, -1, 1, 1)                              # (1,432,H,W)
    y = jnp.einsum('nchw,oc->nohw', xg, w2.reshape(w2.shape[0], -1))   # (1,72,H,W)
    mean = jnp.mean(y, axis=(0, 2, 3), keepdims=True)
    var = jnp.mean((y - mean) ** 2, axis=(0, 2, 3), keepdims=True)
    return gamma.reshape(1, -1, 1, 1) * (y - mean) / jnp.sqrt(var + BN_EPS) \
        + beta.reshape(1, -1, 1, 1)


if __name__ == "__main__":
    key = jax.random.PRNGKey(0)
    k_x, k_se, k_w1, k_b1, k_w2, k_g, k_b = jax.random.split(key, 7)

    N, C_se, C_mid, C_out, H, W = 1, 18, 432, 72, 28, 28

    # Inputs (shapes from the PyTorch module).
    x154 = jax.random.normal(k_x, (N, C_mid, H, W), dtype=jnp.float32)
    x157 = jax.random.normal(k_se, (N, C_se, 1, 1), dtype=jnp.float32)

    # Deterministic synthetic parameters.
    w1 = 0.1 * jax.random.normal(k_w1, (C_mid, C_se, 1, 1), jnp.float32)   # conv2d51.weight
    b1 = 0.1 * jax.random.normal(k_b1, (C_mid,), jnp.float32)              # conv2d51.bias
    w2 = 0.05 * jax.random.normal(k_w2, (C_out, C_mid, 1, 1), jnp.float32) # conv2d52.weight
    gamma = 1.0 + 0.1 * jax.random.normal(k_g, (C_out,), jnp.float32)      # bn.weight
    beta = 0.1 * jax.random.normal(k_b, (C_out,), jnp.float32)             # bn.bias

    ref = _reference(x154, x157, w1, b1, w2, gamma, beta)

    # f32 path: sweep the K tiling (k_tiles=1 is the v7x pick, 2 is the default).
    for kt in (1, 2, 3):
        out = se_conv_bn(x154, x157, w1, b1, w2, gamma, beta, k_tiles=kt)
        out = jax.block_until_ready(out)
        assert out.shape == (N, C_out, H, W)
        assert jnp.allclose(out, ref, atol=1e-3, rtol=1e-3), f"k_tiles={kt} mismatch"

    # v5e-targeted path: bf16 matmul operands, f32 accumulation and BN math.
    # BN normalization absorbs most of the precision loss; tolerance relaxed.
    out_bf16 = se_conv_bn(x154, x157, w1, b1, w2, gamma, beta,
                          k_tiles=2, matmul_dtype=jnp.bfloat16)
    out_bf16 = jax.block_until_ready(out_bf16)
    assert jnp.allclose(out_bf16, ref, atol=2e-2, rtol=2e-2), "bf16 path mismatch"

    print("KERNEL_OK")
</pallas_src>

<mosaic_0001>
module attributes {stable_mosaic.version = 11 : i64} {
  func.func @_se_conv_bn_kernel(%arg0: i32, %arg1: memref<18x1xf32, #tpu.memory_space<vmem>>, %arg2: memref<1x18x432xf32, #tpu.memory_space<vmem>>, %arg3: memref<1x1x432xf32, #tpu.memory_space<vmem>>, %arg4: memref<432x784xf32, #tpu.memory_space<vmem>>, %arg5: memref<1x72x432xf32, #tpu.memory_space<vmem>>, %arg6: memref<72x1xf32, #tpu.memory_space<vmem>>, %arg7: memref<72x1xf32, #tpu.memory_space<vmem>>, %arg8: memref<72x784xf32, #tpu.memory_space<vmem>>, %arg9: memref<72x1xf32, #tpu.memory_space<vmem>>) attributes {dimension_semantics = [#tpu.dimension_semantics<arbitrary>], iteration_bounds = array<i64: 1>, scalar_prefetch = 0 : i64, scratch_operands = 1 : i64, tpu.core_type = #tpu.core_type<tc>, window_params = [{pipeline_mode = #tpu.pipeline_mode<synchronous>, transform_indices = @transform_0, window_bounds = array<i64: 18, 1>}, {transform_indices = @transform_1, window_bounds = array<i64: 1, 18, 432>}, {transform_indices = @transform_2, window_bounds = array<i64: 1, 1, 432>}, {transform_indices = @transform_3, window_bounds = array<i64: 432, 784>}, {transform_indices = @transform_4, window_bounds = array<i64: 1, 72, 432>}, {pipeline_mode = #tpu.pipeline_mode<synchronous>, transform_indices = @transform_5, window_bounds = array<i64: 72, 1>}, {pipeline_mode = #tpu.pipeline_mode<synchronous>, transform_indices = @transform_6, window_bounds = array<i64: 72, 1>}, {pipeline_mode = #tpu.pipeline_mode<synchronous>, transform_indices = @transform_7, window_bounds = array<i64: 72, 784>}]} {
    %c0 = arith.constant 0 : index
    %c0_0 = arith.constant 0 : index
    %c0_1 = arith.constant 0 : index
    %0 = vector.load %arg2[%c0, %c0_0, %c0_1] : memref<1x18x432xf32, #tpu.memory_space<vmem>>, vector<1x18x432xf32>
    %1 = vector.shape_cast %0 : vector<1x18x432xf32> to vector<18x432xf32>
    %c0_2 = arith.constant 0 : index
    %c0_3 = arith.constant 0 : index
    %2 = vector.load %arg1[%c0_2, %c0_3] : memref<18x1xf32, #tpu.memory_space<vmem>>, vector<18x1xf32>
    %3 = vector.broadcast %2 : vector<18x1xf32> to vector<18x432xf32>
    %4 = arith.mulf %1, %3 : vector<18x432xf32>
    %cst = arith.constant dense<0.000000e+00> : vector<432xf32>
    %5 = vector.multi_reduction <add>, %4, %cst [0] : vector<18x432xf32> to vector<432xf32>
    %6 = vector.shape_cast %5 : vector<432xf32> to vector<1x432xf32>
    %c0_4 = arith.constant 0 : index
    %c0_5 = arith.constant 0 : index
    %c0_6 = arith.constant 0 : index
    %7 = vector.load %arg3[%c0_4, %c0_5, %c0_6] : memref<1x1x432xf32, #tpu.memory_space<vmem>>, vector<1x1x432xf32>
    %8 = vector.shape_cast %7 : vector<1x1x432xf32> to vector<1x432xf32>
    %9 = arith.addf %6, %8 : vector<1x432xf32>
    %cst_7 = arith.constant 0.000000e+00 : f32
    %10 = vector.broadcast %cst_7 : f32 to vector<1x432xf32>
    %11 = arith.subf %10, %9 : vector<1x432xf32>
    %12 = math.exp %11 : vector<1x432xf32>
    %cst_8 = arith.constant 1.000000e+00 : f32
    %13 = vector.broadcast %cst_8 : f32 to vector<1x432xf32>
    %14 = arith.addf %13, %12 : vector<1x432xf32>
    %cst_9 = arith.constant 1.000000e+00 : f32
    %15 = vector.broadcast %cst_9 : f32 to vector<1x432xf32>
    %16 = arith.divf %15, %14 : vector<1x432xf32>
    %c0_10 = arith.constant 0 : index
    %c0_11 = arith.constant 0 : index
    %c0_12 = arith.constant 0 : index
    %17 = vector.load %arg5[%c0_10, %c0_11, %c0_12] : memref<1x72x432xf32, #tpu.memory_space<vmem>>, vector<1x72x432xf32>
    %18 = vector.shape_cast %17 : vector<1x72x432xf32> to vector<72x432xf32>
    %19 = vector.broadcast %16 : vector<1x432xf32> to vector<72x432xf32>
    %20 = arith.mulf %18, %19 : vector<72x432xf32>
    %c0_13 = arith.constant 0 : index
    %c0_14 = arith.constant 0 : index
    %21 = vector.load %arg4[%c0_13, %c0_14] : memref<432x784xf32, #tpu.memory_space<vmem>>, vector<432x784xf32>
    %cst_15 = arith.constant dense<0.000000e+00> : vector<72x784xf32>
    %22 = tpu.matmul %20, %21, %cst_15 {dimension_numbers = #tpu.dot_dimension_numbers<[1], [0], [0], [1], [0, 0, 1, 1], [], []>} : vector<72x432xf32>, vector<432x784xf32>, vector<72x784xf32> -> vector<72x784xf32>
    %cst_16 = arith.constant dense<0.000000e+00> : vector<72xf32>
    %23 = vector.multi_reduction <add>, %22, %cst_16 [1] : vector<72x784xf32> to vector<72xf32>
    %24 = vector.shape_cast %23 : vector<72xf32> to vector<72x1xf32>
    %c0_i32 = arith.constant 0 : i32
    %25 = arith.cmpi eq, %arg0, %c0_i32 : i32
    %26 = arith.extui %25 : i1 to i32
    %c0_i32_17 = arith.constant 0 : i32
    %27 = arith.cmpi ne, %26, %c0_i32_17 : i32
    scf.if %27 {
      %c0_22 = arith.constant 0 : index
      %c0_23 = arith.constant 0 : index
      %34 = vector.load %arg8[%c0_22, %c0_23] : memref<72x784xf32, #tpu.memory_space<vmem>>, vector<72x784xf32>
      tpu.vector_store %arg8[%c0_22, %c0_23], %22 {strides = array<i32>} : memref<72x784xf32, #tpu.memory_space<vmem>>, vector<72x784xf32>,
      %c0_24 = arith.constant 0 : index
      %c0_25 = arith.constant 0 : index
      %35 = vector.load %arg9[%c0_24, %c0_25] : memref<72x1xf32, #tpu.memory_space<vmem>>, vector<72x1xf32>
      tpu.vector_store %arg9[%c0_24, %c0_25], %24 {strides = array<i32>} : memref<72x1xf32, #tpu.memory_space<vmem>>, vector<72x1xf32>,
    } else {
    }
    %c0_i32_18 = arith.constant 0 : i32
    %28 = arith.cmpi ne, %arg0, %c0_i32_18 : i32
    %29 = arith.extui %28 : i1 to i32
    %c0_i32_19 = arith.constant 0 : i32
    %30 = arith.cmpi ne, %29, %c0_i32_19 : i32
    scf.if %30 {
      %c0_22 = arith.constant 0 : index
      %c0_23 = arith.constant 0 : index
      %34 = vector.load %arg8[%c0_22, %c0_23] : memref<72x784xf32, #tpu.memory_space<vmem>>, vector<72x784xf32>
      %35 = arith.addf %34, %22 : vector<72x784xf32>
      %c0_24 = arith.constant 0 : index
      %c0_25 = arith.constant 0 : index
      %36 = vector.load %arg8[%c0_24, %c0_25] : memref<72x784xf32, #tpu.memory_space<vmem>>, vector<72x784xf32>
      tpu.vector_store %arg8[%c0_24, %c0_25], %35 {strides = array<i32>} : memref<72x784xf32, #tpu.memory_space<vmem>>, vector<72x784xf32>,
      %c0_26 = arith.constant 0 : index
      %c0_27 = arith.constant 0 : index
      %37 = vector.load %arg9[%c0_26, %c0_27] : memref<72x1xf32, #tpu.memory_space<vmem>>, vector<72x1xf32>
      %38 = arith.addf %37, %24 : vector<72x1xf32>
      %c0_28 = arith.constant 0 : index
      %c0_29 = arith.constant 0 : index
      %39 = vector.load %arg9[%c0_28, %c0_29] : memref<72x1xf32, #tpu.memory_space<vmem>>, vector<72x1xf32>
      tpu.vector_store %arg9[%c0_28, %c0_29], %38 {strides = array<i32>} : memref<72x1xf32, #tpu.memory_space<vmem>>, vector<72x1xf32>,
    } else {
    }
    %c0_i32_20 = arith.constant 0 : i32
    %31 = arith.cmpi eq, %arg0, %c0_i32_20 : i32
    %32 = arith.extui %31 : i1 to i32
    %c0_i32_21 = arith.constant 0 : i32
    %33 = arith.cmpi ne, %32, %c0_i32_21 : i32
    scf.if %33 {
      %c0_22 = arith.constant 0 : index
      %c0_23 = arith.constant 0 : index
      %34 = vector.load %arg8[%c0_22, %c0_23] : memref<72x784xf32, #tpu.memory_space<vmem>>, vector<72x784xf32>
      %c0_24 = arith.constant 0 : index
      %c0_25 = arith.constant 0 : index
      %35 = vector.load %arg9[%c0_24, %c0_25] : memref<72x1xf32, #tpu.memory_space<vmem>>, vector<72x1xf32>
      %cst_26 = arith.constant 0.00127551018 : f32
      %36 = vector.broadcast %cst_26 : f32 to vector<72x1xf32>
      %37 = arith.mulf %35, %36 : vector<72x1xf32>
      %38 = arith.mulf %34, %34 : vector<72x784xf32>
      %cst_27 = arith.constant dense<0.000000e+00> : vector<72xf32>
      %39 = vector.multi_reduction <add>, %38, %cst_27 [1] : vector<72x784xf32> to vector<72xf32>
      %40 = vector.shape_cast %39 : vector<72xf32> to vector<72x1xf32>
      %cst_28 = arith.constant 0.00127551018 : f32
      %41 = vector.broadcast %cst_28 : f32 to vector<72x1xf32>
      %42 = arith.mulf %40, %41 : vector<72x1xf32>
      %43 = arith.mulf %37, %37 : vector<72x1xf32>
      %44 = arith.subf %42, %43 : vector<72x1xf32>
      %c0_29 = arith.constant 0 : index
      %c0_30 = arith.constant 0 : index
      %45 = vector.load %arg6[%c0_29, %c0_30] : memref<72x1xf32, #tpu.memory_space<vmem>>, vector<72x1xf32>
      %cst_31 = arith.constant 1.000000e-03 : f32
      %46 = vector.broadcast %cst_31 : f32 to vector<72x1xf32>
      %47 = arith.addf %44, %46 : vector<72x1xf32>
      %48 = math.rsqrt %47 : vector<72x1xf32>
      %49 = arith.mulf %45, %48 : vector<72x1xf32>
      %c0_32 = arith.constant 0 : index
      %c0_33 = arith.constant 0 : index
      %50 = vector.load %arg7[%c0_32, %c0_33] : memref<72x1xf32, #tpu.memory_space<vmem>>, vector<72x1xf32>
      %51 = arith.mulf %49, %37 : vector<72x1xf32>
      %52 = arith.subf %50, %51 : vector<72x1xf32>
      %53 = vector.broadcast %49 : vector<72x1xf32> to vector<72x784xf32>
      %54 = arith.mulf %34, %53 : vector<72x784xf32>
      %55 = vector.broadcast %52 : vector<72x1xf32> to vector<72x784xf32>
      %56 = arith.addf %54, %55 : vector<72x784xf32>
      %c0_34 = arith.constant 0 : index
      %c0_35 = arith.constant 0 : index
      %57 = vector.load %arg8[%c0_34, %c0_35] : memref<72x784xf32, #tpu.memory_space<vmem>>, vector<72x784xf32>
      tpu.vector_store %arg8[%c0_34, %c0_35], %56 {strides = array<i32>} : memref<72x784xf32, #tpu.memory_space<vmem>>, vector<72x784xf32>,
    } else {
    }
    return
  }
  func.func @transform_0(%arg0: i32) -> (i32, i32) {
    %c0_i32 = arith.constant 0 : i32
    %c0_i32_0 = arith.constant 0 : i32
    %c0_i32_1 = arith.constant 0 : i32
    return %c0_i32, %c0_i32_0 : i32, i32
  }
  func.func @transform_1(%arg0: i32) -> (i32, i32, i32) {
    %c0_i32 = arith.constant 0 : i32
    %c0_i32_0 = arith.constant 0 : i32
    %c0_i32_1 = arith.constant 0 : i32
    return %arg0, %c0_i32, %c0_i32_0 : i32, i32, i32
  }
  func.func @transform_2(%arg0: i32) -> (i32, i32, i32) {
    %c0_i32 = arith.constant 0 : i32
    %c0_i32_0 = arith.constant 0 : i32
    %c0_i32_1 = arith.constant 0 : i32
    return %arg0, %c0_i32, %c0_i32_0 : i32, i32, i32
  }
  func.func @transform_3(%arg0: i32) -> (i32, i32) {
    %c0_i32 = arith.constant 0 : i32
    %c0_i32_0 = arith.constant 0 : i32
    return %arg0, %c0_i32 : i32, i32
  }
  func.func @transform_4(%arg0: i32) -> (i32, i32, i32) {
    %c0_i32 = arith.constant 0 : i32
    %c0_i32_0 = arith.constant 0 : i32
    %c0_i32_1 = arith.constant 0 : i32
    return %arg0, %c0_i32, %c0_i32_0 : i32, i32, i32
  }
  func.func @transform_5(%arg0: i32) -> (i32, i32) {
    %c0_i32 = arith.constant 0 : i32
    %c0_i32_0 = arith.constant 0 : i32
    %c0_i32_1 = arith.constant 0 : i32
    return %c0_i32, %c0_i32_0 : i32, i32
  }
  func.func @transform_6(%arg0: i32) -> (i32, i32) {
    %c0_i32 = arith.constant 0 : i32
    %c0_i32_0 = arith.constant 0 : i32
    %c0_i32_1 = arith.constant 0 : i32
    return %c0_i32, %c0_i32_0 : i32, i32
  }
  func.func @transform_7(%arg0: i32) -> (i32, i32) {
    %c0_i32 = arith.constant 0 : i32
    %c0_i32_0 = arith.constant 0 : i32
    %c0_i32_1 = arith.constant 0 : i32
    return %c0_i32, %c0_i32_0 : i32, i32
  }
}

</mosaic_0001>

<llo_original>
// kernel: tpu_custom_call.1
$region0: #{tpu_custom_call.1}
  #allocation0 [shape = 'u32[]', space=smem, size = 0x4, offset = 0x4, fixed_abs, tag = 'smem constant byte address 0x4 - core index']
  #allocation1 [shape = 'u32[144,128]{1,0:T(1,128)}', space=vmem, size = 0x12000, scoped, tag = 'internal scratch']
  #allocation2 [shape = 'f32[72,1]{1,0:T(8,128)}', space=vmem, size = 0x9000, scoped, tag = 'scratch operand']
  %s0 = inlined_call_operand.vmem [shape: f32[18,1], index: 0, kind: input, shape index: {}]
  %s1 = inlined_call_operand.vmem [shape: f32[1,18,432], index: 1, kind: input, shape index: {}]
  %s2 = inlined_call_operand.hbm [shape: f32[1,1,432], index: 2, kind: input, shape index: {}]
  %s3 = inlined_call_operand.hbm [shape: f32[432,784], index: 3, kind: input, shape index: {}]
  %s4 = inlined_call_operand.hbm [shape: f32[1,72,432], index: 4, kind: input, shape index: {}]
  %s5 = inlined_call_operand.vmem [shape: f32[72,1], index: 5, kind: input, shape index: {}]
  %s6 = inlined_call_operand.vmem [shape: f32[72,1], index: 6, kind: input, shape index: {}]
  %s7 = inlined_call_operand.hbm [shape: f32[72,784], index: 7, kind: output, shape index: {}]
  %s8 = sld [smem:[#allocation0]]
  $region62: #{tpu_custom_call.1} parent=0
    _
  %s10 = ssub.s32 1, %s8
  %s11 = scalar_select 0, %s10, %s8
  $region1: #{tpu_custom_call.1} parent=0
    #allocation3 [shape = 'u8[2048]{0}', space=vmem, size = 0x800, scoped, tag = 'input window, operand 2, single buffered']
    #allocation4 [shape = 's32[1]{0}', space=sflag, size = 0x4, scoped, tag = 'scoped memory for tpu_custom_call.1']
    #allocation5 [shape = 's32[1]{0}', space=sflag, size = 0x4, scoped, tag = 'scoped memory for tpu_custom_call.1']
    #allocation6 [shape = 'u8[1548288]{0}', space=vmem, size = 0x17a000, scoped, tag = 'input window, operand 3, single buffered']
    #allocation7 [shape = 's32[1]{0}', space=sflag, size = 0x4, scoped, tag = 'scoped memory for tpu_custom_call.1']
    #allocation8 [shape = 'u8[147456]{0}', space=vmem, size = 0x24000, scoped, tag = 'input window, operand 4, single buffered']
    #allocation9 [shape = 'u8[258048]{0}', space=vmem, size = 0x3f000, scoped, tag = 'output window, operand 0, single buffered']
    %12 = vsyncpa [#allocation4], 0
    %13 = vsyncpa [#allocation7], 0
    %14 = vsyncpa [#allocation5], 0
    // Predicated region
    $region2: #{tpu_custom_call.1} parent=1 // pred_check
      _
    $region3: #{tpu_custom_call.1} parent=1 // pred_check_branch
      %16 = sbr.rel (0) target = $region5
    $region4: #{tpu_custom_call.1} parent=1 // pred_region
      _
    $region5: #{tpu_custom_call.1} parent=1 // pred_fallthru
      _
    // Predicated region
    $region6: #{tpu_custom_call.1} parent=1 // pred_check
      _
    $region7: #{tpu_custom_call.1} parent=1 // pred_check_branch
      %18 = sbr.rel (0) target = $region9
    $region8: #{tpu_custom_call.1} parent=1 // pred_region
      _
    $region9: #{tpu_custom_call.1} parent=1 // pred_fallthru
      _
    // Predicated region
    $region10: #{tpu_custom_call.1} parent=1 // pred_check
      _
    $region11: #{tpu_custom_call.1} parent=1 // pred_check_branch
      %20 = sbr.rel (0) target = $region13
    $region12: #{tpu_custom_call.1} parent=1 // pred_region
      %s22 = ssub.s32 64, 64
      %23 = vsyncadd [#allocation4], %s22
      %s25 = sshll.u32 [#allocation3], 4
      %s26 = int_to_ptr.vmem [resolvable:$true] %s25
      %28 = dma.hbm_to_vmem [thread:$0]  %s2, 64, %s26, [#allocation4]
    $region13: #{tpu_custom_call.1} parent=1 // pred_fallthru
      _
    // Predicated region
    $region14: #{tpu_custom_call.1} parent=1 // pred_check
      _
    $region15: #{tpu_custom_call.1} parent=1 // pred_check_branch
      %30 = sbr.rel (0) target = $region17
    $region16: #{tpu_custom_call.1} parent=1 // pred_region
      %s32 = ssub.s32 48384, 48384
      %33 = vsyncadd [#allocation7], %s32
      %s34 = sshll.u32 [#allocation6], 4
      %s35 = int_to_ptr.vmem [resolvable:$true] %s34
      %40 = dma.hbm_to_vmem [thread:$0]  %s3, 48384, %s35, [#allocation7], 896, 896, 56
    $region17: #{tpu_custom_call.1} parent=1 // pred_fallthru
      _
    // Predicated region
    $region18: #{tpu_custom_call.1} parent=1 // pred_check
      _
    $region19: #{tpu_custom_call.1} parent=1 // pred_check_branch
      %42 = sbr.rel (0) target = $region21
    $region20: #{tpu_custom_call.1} parent=1 // pred_region
      %s44 = ssub.s32 4608, 4608
      %45 = vsyncadd [#allocation7], %s44
      %s46 = sshll.u32 [#allocation8], 4
      %s47 = int_to_ptr.vmem [resolvable:$true] %s46
      %52 = dma.hbm_to_vmem [thread:$0]  %s4, 4608, %s47, [#allocation7], 512, 512, 32
    $region21: #{tpu_custom_call.1} parent=1 // pred_fallthru
      _
    // Predicated region
    $region22: #{tpu_custom_call.1} parent=1 // pred_check
      _
    $region23: #{tpu_custom_call.1} parent=1 // pred_check_branch
      %54 = sbr.rel (0) target = $region25
    $region24: #{tpu_custom_call.1} parent=1 // pred_region
      _
    $region25: #{tpu_custom_call.1} parent=1 // pred_fallthru
      _
    // Predicated region
    $region26: #{tpu_custom_call.1} parent=1 // pred_check
      _
    $region27: #{tpu_custom_call.1} parent=1 // pred_check_branch
      %56 = sbr.rel (0) target = $region29
    $region28: #{tpu_custom_call.1} parent=1 // pred_region
      _
    $region29: #{tpu_custom_call.1} parent=1 // pred_fallthru
      _
    // Predicated region
    $region30: #{tpu_custom_call.1} parent=1 // pred_check
      _
    $region31: #{tpu_custom_call.1} parent=1 // pred_check_branch
      %58 = sbr.rel (0) target = $region33
    $region32: #{tpu_custom_call.1} parent=1 // pred_region
      %59 = dma.done [#allocation4], 64
    $region33: #{tpu_custom_call.1} parent=1 // pred_fallthru
      _
    // Predicated region
    $region34: #{tpu_custom_call.1} parent=1 // pred_check
      _
    $region35: #{tpu_custom_call.1} parent=1 // pred_check_branch
      %61 = sbr.rel (0) target = $region37
    $region36: #{tpu_custom_call.1} parent=1 // pred_region
      %62 = dma.done [#allocation7], 48384
    $region37: #{tpu_custom_call.1} parent=1 // pred_fallthru
      _
    // Predicated region
    $region38: #{tpu_custom_call.1} parent=1 // pred_check
      _
    $region39: #{tpu_custom_call.1} parent=1 // pred_check_branch
      %64 = sbr.rel (0) target = $region41
    $region40: #{tpu_custom_call.1} parent=1 // pred_region
      %65 = dma.done [#allocation7], 4608
    $region41: #{tpu_custom_call.1} parent=1 // pred_fallthru
      _
    %v66 = vld [vmem:[%s1] sm:$0xff]
    %v67 = vld [vmem:[%s1 + $0x8] sm:$0xff]
    %v68 = vld [vmem:[%s1 + $0x10] sm:$0xff]
    %v69 = vld [vmem:[%s1 + $0x18] sm:$0xff]
    %v70 = vld [vmem:[%s1 + $0x20] sm:$0xff]
    %v71 = vld [vmem:[%s1 + $0x28] sm:$0xff]
    %v72 = vld [vmem:[%s1 + $0x30] sm:$0xff]
    %v73 = vld [vmem:[%s1 + $0x38] sm:$0xff]
    %v74 = vld [vmem:[%s1 + $0x40] sm:$0x3]
    %v75 = vld [vmem:[%s1 + $0x48] sm:$0x3]
    %v76 = vld [vmem:[%s1 + $0x50] sm:$0x3]
    %v77 = vld [vmem:[%s1 + $0x58] sm:$0x3]
    %v78 = vld [vmem:[%s0] sm:$0xff]
    %v79 = vld [vmem:[%s0 + $0x8] sm:$0xff]
    %v80 = vld [vmem:[%s0 + $0x10] sm:$0x3]
    %82 = vset.pattern.permute.xlu0 0
    %83 = vperm.xlu0 %82, %v78
    %v84 = vpop.permute.xlu0 %83
    %87 = vset.pattern.permute.xlu0 0
    %88 = vperm.xlu0 %87, %v79
    %v89 = vpop.permute.xlu0 %88
    %92 = vset.pattern.permute.xlu0 0
    %93 = vperm.xlu0 %92, %v80
    %v94 = vpop.permute.xlu0 %93
    %v96 = vmul.f32 %v66, %v84
    %v97 = vmul.f32 %v67, %v84
    %v98 = vmul.f32 %v68, %v84
    %v99 = vmul.f32 %v69, %v84
    %v100 = vmul.f32 %v70, %v89
    %v101 = vmul.f32 %v71, %v89
    %v102 = vmul.f32 %v72, %v89
    %v103 = vmul.f32 %v73, %v89
    %v104 = vmul.f32 %v74, %v94
    %v105 = vmul.f32 %v75, %v94
    %v106 = vmul.f32 %v76, %v94
    %v107 = vmul.f32 %v77, %v94
    %v108 = vadd.f32 %v96, %v100
    %vm109 = vcmask 1041408
    %v110 = vsel %vm109, %v104, 0.0
    %v111 = vadd.f32 %v108, %v110
    %v112 = vrot.slane %v111, 4
    %v113 = vadd.f32 %v111, %v112
    %v114 = vrot.slane %v113, 2
    %v115 = vadd.f32 %v113, %v114
    %v116 = vrot.slane %v115, 1
    %v117 = vadd.f32 %v115, %v116
    %v118 = vadd.f32 %v97, %v101
    %v119 = vsel %vm109, %v105, 0.0
    %v120 = vadd.f32 %v118, %v119
    %v121 = vrot.slane %v120, 4
    %v122 = vadd.f32 %v120, %v121
    %v123 = vrot.slane %v122, 2
    %v124 = vadd.f32 %v122, %v123
    %v125 = vrot.slane %v124, 1
    %v126 = vadd.f32 %v124, %v125
    %v127 = vadd.f32 %v98, %v102
    %v128 = vsel %vm109, %v106, 0.0
    %v129 = vadd.f32 %v127, %v128
    %v130 = vrot.slane %v129, 4
    %v131 = vadd.f32 %v129, %v130
    %v132 = vrot.slane %v131, 2
    %v133 = vadd.f32 %v131, %v132
    %v134 = vrot.slane %v133, 1
    %v135 = vadd.f32 %v133, %v134
    %vm136 = vcmask 392192
    %v137 = vsel %vm136, %v99, 0.0
    %v138 = vsel %vm136, %v103, 0.0
    %v139 = vadd.f32 %v137, %v138
    %vm140 = vcmask 386048
    %v141 = vsel %vm140, %v107, 0.0
    %v142 = vadd.f32 %v139, %v141
    %v143 = vrot.slane %v142, 4
    %v144 = vadd.f32 %v142, %v143
    %v145 = vrot.slane %v144, 2
    %v146 = vadd.f32 %v144, %v145
    %v147 = vrot.slane %v146, 1
    %v148 = vadd.f32 %v146, %v147
    %v149 = vld [vmem:[#allocation3] sm:$0xf]
    %v151 = vlaneseq
    %v152 = vshrl.u32 %v151, 7
    %v153 = vsub.s32 0, %v152
    %v154 = vrot.slane %v149, %v153
    %v155 = vlaneseq
    %v156 = vshrl.u32 %v155, 7
    %v157 = vsub.s32 1, %v156
    %v158 = vrot.slane %v149, %v157
    %v159 = vlaneseq
    %v160 = vshrl.u32 %v159, 7
    %v161 = vsub.s32 2, %v160
    %v162 = vrot.slane %v149, %v161
    %v163 = vlaneseq
    %v164 = vshrl.u32 %v163, 7
    %v165 = vsub.s32 3, %v164
    %v166 = vrot.slane %v149, %v165
    %v171 = vadd.f32 %v117, %v154
    %v172 = vadd.f32 %v126, %v158
    %v173 = vadd.f32 %v135, %v162
    %v174 = vadd.f32 %v148, %v166
    %v175 = vsub.f32 0.0, %v171
    %v176 = vsub.f32 0.0, %v172
    %v177 = vsub.f32 0.0, %v173
    %v178 = vsub.f32 0.0, %v174
    %v179 = vmul.f32 %v175, 1.442695
    %v180 = vpow.pop %v179
    %v181 = vmul.f32 %v176, 1.442695
    %v182 = vpow.pop %v181
    %v183 = vmul.f32 %v177, 1.442695
    %v184 = vpow.pop %v183
    %v185 = vmul.f32 %v178, 1.442695
    %v186 = vpow.pop %v185
    %v187 = vadd.f32 %v180, 1.0
    %v188 = vadd.f32 %v182, 1.0
    %v189 = vadd.f32 %v184, 1.0
    %v190 = vadd.f32 %v186, 1.0
    %v191 = vrcp.pop %v187
    %v192 = vmul.f32 1.0, %v191
    %v193 = vrcp.pop %v188
    %v194 = vmul.f32 1.0, %v193
    %v195 = vrcp.pop %v189
    %v196 = vmul.f32 1.0, %v195
    %v197 = vrcp.pop %v190
    %v198 = vmul.f32 1.0, %v197
    %v199 = vld [vmem:[#allocation8] sm:$0xff]
    %v200 = vld [vmem:[#allocation8 + $0x8] sm:$0xff]
    %v201 = vld [vmem:[#allocation8 + $0x10] sm:$0xff]
    %v202 = vld [vmem:[#allocation8 + $0x18] sm:$0xff]
    %v203 = vld [vmem:[#allocation8 + $0x20] sm:$0xff]
    %v204 = vld [vmem:[#allocation8 + $0x28] sm:$0xff]
    %v205 = vld [vmem:[#allocation8 + $0x30] sm:$0xff]
    %v206 = vld [vmem:[#allocation8 + $0x38] sm:$0xff]
    %v207 = vld [vmem:[#allocation8 + $0x40] sm:$0xff]
    %v208 = vld [vmem:[#allocation8 + $0x48] sm:$0xff]
    %v209 = vld [vmem:[#allocation8 + $0x50] sm:$0xff]
    %v210 = vld [vmem:[#allocation8 + $0x58] sm:$0xff]
    %v211 = vld [vmem:[#allocation8 + $0x60] sm:$0xff]
    %v212 = vld [vmem:[#allocation8 + $0x68] sm:$0xff]
    %v213 = vld [vmem:[#allocation8 + $0x70] sm:$0xff]
    %v214 = vld [vmem:[#allocation8 + $0x78] sm:$0xff]
    %v215 = vld [vmem:[#allocation8 + $0x80] sm:$0xff]
    %v216 = vld [vmem:[#allocation8 + $0x88] sm:$0xff]
    %v217 = vld [vmem:[#allocation8 + $0x90] sm:$0xff]
    %v218 = vld [vmem:[#allocation8 + $0x98] sm:$0xff]
    %v219 = vld [vmem:[#allocation8 + $0xa0] sm:$0xff]
    %v220 = vld [vmem:[#allocation8 + $0xa8] sm:$0xff]
    %v221 = vld [vmem:[#allocation8 + $0xb0] sm:$0xff]
    %v222 = vld [vmem:[#allocation8 + $0xb8] sm:$0xff]
    %v223 = vld [vmem:[#allocation8 + $0xc0] sm:$0xff]
    %v224 = vld [vmem:[#allocation8 + $0xc8] sm:$0xff]
    %v225 = vld [vmem:[#allocation8 + $0xd0] sm:$0xff]
    %v226 = vld [vmem:[#allocation8 + $0xd8] sm:$0xff]
    %v227 = vld [vmem:[#allocation8 + $0xe0] sm:$0xff]
    %v228 = vld [vmem:[#allocation8 + $0xe8] sm:$0xff]
    %v229 = vld [vmem:[#allocation8 + $0xf0] sm:$0xff]
    %v230 = vld [vmem:[#allocation8 + $0xf8] sm:$0xff]
    %v231 = vld [vmem:[#allocation8 + $0x100] sm:$0xff]
    %v232 = vld [vmem:[#allocation8 + $0x108] sm:$0xff]
    %v233 = vld [vmem:[#allocation8 + $0x110] sm:$0xff]
    %v234 = vld [vmem:[#allocation8 + $0x118] sm:$0xff]
    %v235 = vlaneseq
    %v236 = vshrl.u32 %v235, 7
    %v237 = vsub.s32 0, %v236
    %v238 = vrot.slane %v192, %v237
    %v239 = vlaneseq
    %v240 = vshrl.u32 %v239, 7
    %v241 = vsub.s32 0, %v240
    %v242 = vrot.slane %v194, %v241
    %v243 = vlaneseq
    %v244 = vshrl.u32 %v243, 7
    %v245 = vsub.s32 0, %v244
    %v246 = vrot.slane %v196, %v245
    %v247 = vlaneseq
    %v248 = vshrl.u32 %v247, 7
    %v249 = vsub.s32 0, %v248
    %v250 = vrot.slane %v198, %v249
    %v251 = vmul.f32 %v199, %v238
    %v252 = vmul.f32 %v200, %v242
    %v253 = vmul.f32 %v201, %v246
    %v254 = vmul.f32 %v202, %v250
    %v255 = vmul.f32 %v203, %v238
    %v256 = vmul.f32 %v204, %v242
    %v257 = vmul.f32 %v205, %v246
    %v258 = vmul.f32 %v206, %v250
    %v259 = vmul.f32 %v207, %v238
    %v260 = vmul.f32 %v208, %v242
    %v261 = vmul.f32 %v209, %v246
    %v262 = vmul.f32 %v210, %v250
    %v263 = vmul.f32 %v211, %v238
    %v264 = vmul.f32 %v212, %v242
    %v265 = vmul.f32 %v213, %v246
    %v266 = vmul.f32 %v214, %v250
    %v267 = vmul.f32 %v215, %v238
    %v268 = vmul.f32 %v216, %v242
    %v269 = vmul.f32 %v217, %v246
    %v270 = vmul.f32 %v218, %v250
    %v271 = vmul.f32 %v219, %v238
    %v272 = vmul.f32 %v220, %v242
    %v273 = vmul.f32 %v221, %v246
    %v274 = vmul.f32 %v222, %v250
    %v275 = vmul.f32 %v223, %v238
    %v276 = vmul.f32 %v224, %v242
    %v277 = vmul.f32 %v225, %v246
    %v278 = vmul.f32 %v226, %v250
    %v279 = vmul.f32 %v227, %v238
    %v280 = vmul.f32 %v228, %v242
    %v281 = vmul.f32 %v229, %v246
    %v282 = vmul.f32 %v230, %v250
    %v283 = vmul.f32 %v231, %v238
    %v284 = vmul.f32 %v232, %v242
    %v285 = vmul.f32 %v233, %v246
    %v286 = vmul.f32 %v234, %v250
    %v287 = vld [vmem:[#allocation6] sm:$0xff]
    %v288 = vld [vmem:[#allocation6 + $0x8] sm:$0xff]
    %v289 = vld [vmem:[#allocation6 + $0x10] sm:$0xff]
    %v290 = vld [vmem:[#allocation6 + $0x18] sm:$0xff]
    %v291 = vld [vmem:[#allocation6 + $0x20] sm:$0xff]
    %v292 = vld [vmem:[#allocation6 + $0x28] sm:$0xff]
    %v293 = vld [vmem:[#allocation6 + $0x30] sm:$0xff]
    %v294 = vld [vmem:[#allocation6 + $0x38] sm:$0xff]
    %v295 = vld [vmem:[#allocation6 + $0x40] sm:$0xff]
    %v296 = vld [vmem:[#allocation6 + $0x48] sm:$0xff]
    %v297 = vld [vmem:[#allocation6 + $0x50] sm:$0xff]
    %v298 = vld [vmem:[#allocation6 + $0x58] sm:$0xff]
    %v299 = vld [vmem:[#allocation6 + $0x60] sm:$0xff]
    %v300 = vld [vmem:[#allocation6 + $0x68] sm:$0xff]
    %v301 = vld [vmem:[#allocation6 + $0x70] sm:$0xff]
    %v302 = vld [vmem:[#allocation6 + $0x78] sm:$0xff]
    %v303 = vld [vmem:[#allocation6 + $0x80] sm:$0xff]
    %v304 = vld [vmem:[#allocation6 + $0x88] sm:$0xff]
    %v305 = vld [vmem:[#allocation6 + $0x90] sm:$0xff]
    %v306 = vld [vmem:[#allocation6 + $0x98] sm:$0xff]
    %v307 = vld [vmem:[#allocation6 + $0xa0] sm:$0xff]
    %v308 = vld [vmem:[#allocation6 + $0xa8] sm:$0xff]
    %v309 = vld [vmem:[#allocation6 + $0xb0] sm:$0xff]
    %v310 = vld [vmem:[#allocation6 + $0xb8] sm:$0xff]
    %v311 = vld [vmem:[#allocation6 + $0xc0] sm:$0xff]
    %v312 = vld [vmem:[#allocation6 + $0xc8] sm:$0xff]
    %v313 = vld [vmem:[#allocation6 + $0xd0] sm:$0xff]
    %v314 = vld [vmem:[#allocation6 + $0xd8] sm:$0xff]
    %v315 = vld [vmem:[#allocation6 + $0xe0] sm:$0xff]
    %v316 = vld [vmem:[#allocation6 + $0xe8] sm:$0xff]
    %v317 = vld [vmem:[#allocation6 + $0xf0] sm:$0xff]
    %v318 = vld [vmem:[#allocation6 + $0xf8] sm:$0xff]
    %v319 = vld [vmem:[#allocation6 + $0x100] sm:$0xff]
    %v320 = vld [vmem:[#allocation6 + $0x108] sm:$0xff]
    %v321 = vld [vmem:[#allocation6 + $0x110] sm:$0xff]
    %v322 = vld [vmem:[#allocation6 + $0x118] sm:$0xff]
    %v323 = vld [vmem:[#allocation6 + $0x120] sm:$0xff]
    %v324 = vld [vmem:[#allocation6 + $0x128] sm:$0xff]
    %v325 = vld [vmem:[#allocation6 + $0x130] sm:$0xff]
    %v326 = vld [vmem:[#allocation6 + $0x138] sm:$0xff]
    %v327 = vld [vmem:[#allocation6 + $0x140] sm:$0xff]
    %v328 = vld [vmem:[#allocation6 + $0x148] sm:$0xff]
    %v329 = vld [vmem:[#allocation6 + $0x150] sm:$0xff]
    %v330 = vld [vmem:[#allocation6 + $0x158] sm:$0xff]
    %v331 = vld [vmem:[#allocation6 + $0x160] sm:$0xff]
    %v332 = vld [vmem:[#allocation6 + $0x168] sm:$0xff]
    %v333 = vld [vmem:[#allocation6 + $0x170] sm:$0xff]
    %v334 = vld [vmem:[#allocation6 + $0x178] sm:$0xff]
    %v335 = vld [vmem:[#allocation6 + $0x180] sm:$0xff]
    %v336 = vld [vmem:[#allocation6 + $0x188] sm:$0xff]
    %v337 = vld [vmem:[#allocation6 + $0x190] sm:$0xff]
    %v338 = vld [vmem:[#allocation6 + $0x198] sm:$0xff]
    %v339 = vld [vmem:[#allocation6 + $0x1a0] sm:$0xff]
    %v340 = vld [vmem:[#allocation6 + $0x1a8] sm:$0xff]
    %v341 = vld [vmem:[#allocation6 + $0x1b0] sm:$0xff]
    %v342 = vld [vmem:[#allocation6 + $0x1b8] sm:$0xff]
    %v343 = vld [vmem:[#allocation6 + $0x1c0] sm:$0xff]
    %v344 = vld [vmem:[#allocation6 + $0x1c8] sm:$0xff]
    %v345 = vld [vmem:[#allocation6 + $0x1d0] sm:$0xff]
    %v346 = vld [vmem:[#allocation6 + $0x1d8] sm:$0xff]
    %v347 = vld [vmem:[#allocation6 + $0x1e0] sm:$0xff]
    %v348 = vld [vmem:[#allocation6 + $0x1e8] sm:$0xff]
    %v349 = vld [vmem:[#allocation6 + $0x1f0] sm:$0xff]
    %v350 = vld [vmem:[#allocation6 + $0x1f8] sm:$0xff]
    %v351 = vld [vmem:[#allocation6 + $0x200] sm:$0xff]
    %v352 = vld [vmem:[#allocation6 + $0x208] sm:$0xff]
    %v353 = vld [vmem:[#allocation6 + $0x210] sm:$0xff]
    %v354 = vld [vmem:[#allocation6 + $0x218] sm:$0xff]
    %v355 = vld [vmem:[#allocation6 + $0x220] sm:$0xff]
    %v356 = vld [vmem:[#allocation6 + $0x228] sm:$0xff]
    %v357 = vld [vmem:[#allocation6 + $0x230] sm:$0xff]
    %v358 = vld [vmem:[#allocation6 + $0x238] sm:$0xff]
    %v359 = vld [vmem:[#allocation6 + $0x240] sm:$0xff]
    %v360 = vld [vmem:[#allocation6 + $0x248] sm:$0xff]
    %v361 = vld [vmem:[#allocation6 + $0x250] sm:$0xff]
    %v362 = vld [vmem:[#allocation6 + $0x258] sm:$0xff]
    %v363 = vld [vmem:[#allocation6 + $0x260] sm:$0xff]
    %v364 = vld [vmem:[#allocation6 + $0x268] sm:$0xff]
    %v365 = vld [vmem:[#allocation6 + $0x270] sm:$0xff]
    %v366 = vld [vmem:[#allocation6 + $0x278] sm:$0xff]
    %v367 = vld [vmem:[#allocation6 + $0x280] sm:$0xff]
    %v368 = vld [vmem:[#allocation6 + $0x288] sm:$0xff]
    %v369 = vld [vmem:[#allocation6 + $0x290] sm:$0xff]
    %v370 = vld [vmem:[#allocation6 + $0x298] sm:$0xff]
    %v371 = vld [vmem:[#allocation6 + $0x2a0] sm:$0xff]
    %v372 = vld [vmem:[#allocation6 + $0x2a8] sm:$0xff]
    %v373 = vld [vmem:[#allocation6 + $0x2b0] sm:$0xff]
    %v374 = vld [vmem:[#allocation6 + $0x2b8] sm:$0xff]
    %v375 = vld [vmem:[#allocation6 + $0x2c0] sm:$0xff]
    %v376 = vld [vmem:[#allocation6 + $0x2c8] sm:$0xff]
    %v377 = vld [vmem:[#allocation6 + $0x2d0] sm:$0xff]
    %v378 = vld [vmem:[#allocation6 + $0x2d8] sm:$0xff]
    %v379 = vld [vmem:[#allocation6 + $0x2e0] sm:$0xff]
    %v380 = vld [vmem:[#allocation6 + $0x2e8] sm:$0xff]
    %v381 = vld [vmem:[#allocation6 + $0x2f0] sm:$0xff]
    %v382 = vld [vmem:[#allocation6 + $0x2f8] sm:$0xff]
    %v383 = vld [vmem:[#allocation6 + $0x300] sm:$0xff]
    %v384 = vld [vmem:[#allocation6 + $0x308] sm:$0xff]
    %v385 = vld [vmem:[#allocation6 + $0x310] sm:$0xff]
    %v386 = vld [vmem:[#allocation6 + $0x318] sm:$0xff]
    %v387 = vld [vmem:[#allocation6 + $0x320] sm:$0xff]
    %v388 = vld [vmem:[#allocation6 + $0x328] sm:$0xff]
    %v389 = vld [vmem:[#allocation6 + $0x330] sm:$0xff]
    %v390 = vld [vmem:[#allocation6 + $0x338] sm:$0xff]
    %v391 = vld [vmem:[#allocation6 + $0x340] sm:$0xff]
    %v392 = vld [vmem:[#allocation6 + $0x348] sm:$0xff]
    %v393 = vld [vmem:[#allocation6 + $0x350] sm:$0xff]
    %v394 = vld [vmem:[#allocation6 + $0x358] sm:$0xff]
    %v395 = vld [vmem:[#allocation6 + $0x360] sm:$0xff]
    %v396 = vld [vmem:[#allocation6 + $0x368] sm:$0xff]
    %v397 = vld [vmem:[#allocation6 + $0x370] sm:$0xff]
    %v398 = vld [vmem:[#allocation6 + $0x378] sm:$0xff]
    %v399 = vld [vmem:[#allocation6 + $0x380] sm:$0xff]
    %v400 = vld [vmem:[#allocation6 + $0x388] sm:$0xff]
    %v401 = vld [vmem:[#allocation6 + $0x390] sm:$0xff]
    %v402 = vld [vmem:[#allocation6 + $0x398] sm:$0xff]
    %v403 = vld [vmem:[#allocation6 + $0x3a0] sm:$0xff]
    %v404 = vld [vmem:[#allocation6 + $0x3a8] sm:$0xff]
    %v405 = vld [vmem:[#allocation6 + $0x3b0] sm:$0xff]
    %v406 = vld [vmem:[#allocation6 + $0x3b8] sm:$0xff]
    %v407 = vld [vmem:[#allocation6 + $0x3c0] sm:$0xff]
    %v408 = vld [vmem:[#allocation6 + $0x3c8] sm:$0xff]
    %v409 = vld [vmem:[#allocation6 + $0x3d0] sm:$0xff]
    %v410 = vld [vmem:[#allocation6 + $0x3d8] sm:$0xff]
    %v411 = vld [vmem:[#allocation6 + $0x3e0] sm:$0xff]
    %v412 = vld [vmem:[#allocation6 + $0x3e8] sm:$0xff]
    %v413 = vld [vmem:[#allocation6 + $0x3f0] sm:$0xff]
    %v414 = vld [vmem:[#allocation6 + $0x3f8] sm:$0xff]
    %v415 = vld [vmem:[#allocation6 + $0x400] sm:$0xff]
    %v416 = vld [vmem:[#allocation6 + $0x408] sm:$0xff]
    %v417 = vld [vmem:[#allocation6 + $0x410] sm:$0xff]
    %v418 = vld [vmem:[#allocation6 + $0x418] sm:$0xff]
    %v419 = vld [vmem:[#allocation6 + $0x420] sm:$0xff]
    %v420 = vld [vmem:[#allocation6 + $0x428] sm:$0xff]
    %v421 = vld [vmem:[#allocation6 + $0x430] sm:$0xff]
    %v422 = vld [vmem:[#allocation6 + $0x438] sm:$0xff]
    %v423 = vld [vmem:[#allocation6 + $0x440] sm:$0xff]
    %v424 = vld [vmem:[#allocation6 + $0x448] sm:$0xff]
    %v425 = vld [vmem:[#allocation6 + $0x450] sm:$0xff]
    %v426 = vld [vmem:[#allocation6 + $0x458] sm:$0xff]
    %v427 = vld [vmem:[#allocation6 + $0x460] sm:$0xff]
    %v428 = vld [vmem:[#allocation6 + $0x468] sm:$0xff]
    %v429 = vld [vmem:[#allocation6 + $0x470] sm:$0xff]
    %v430 = vld [vmem:[#allocation6 + $0x478] sm:$0xff]
    %v431 = vld [vmem:[#allocation6 + $0x480] sm:$0xff]
    %v432 = vld [vmem:[#allocation6 + $0x488] sm:$0xff]
    %v433 = vld [vmem:[#allocation6 + $0x490] sm:$0xff]
    %v434 = vld [vmem:[#allocation6 + $0x498] sm:$0xff]
    %v435 = vld [vmem:[#allocation6 + $0x4a0] sm:$0xff]
    %v436 = vld [vmem:[#allocation6 + $0x4a8] sm:$0xff]
    %v437 = vld [vmem:[#allocation6 + $0x4b0] sm:$0xff]
    %v438 = vld [vmem:[#allocation6 + $0x4b8] sm:$0xff]
    %v439 = vld [vmem:[#allocation6 + $0x4c0] sm:$0xff]
    %v440 = vld [vmem:[#allocation6 + $0x4c8] sm:$0xff]
    %v441 = vld [vmem:[#allocation6 + $0x4d0] sm:$0xff]
    %v442 = vld [vmem:[#allocation6 + $0x4d8] sm:$0xff]
    %v443 = vld [vmem:[#allocation6 + $0x4e0] sm:$0xff]
    %v444 = vld [vmem:[#allocation6 + $0x4e8] sm:$0xff]
    %v445 = vld [vmem:[#allocation6 + $0x4f0] sm:$0xff]
    %v446 = vld [vmem:[#allocation6 + $0x4f8] sm:$0xff]
    %v447 = vld [vmem:[#allocation6 + $0x500] sm:$0xff]
    %v448 = vld [vmem:[#allocation6 + $0x508] sm:$0xff]
    %v449 = vld [vmem:[#allocation6 + $0x510] sm:$0xff]
    %v450 = vld [vmem:[#allocation6 + $0x518] sm:$0xff]
    %v451 = vld [vmem:[#allocation6 + $0x520] sm:$0xff]
    %v452 = vld [vmem:[#allocation6 + $0x528] sm:$0xff]
    %v453 = vld [vmem:[#allocation6 + $0x530] sm:$0xff]
    %v454 = vld [vmem:[#allocation6 + $0x538] sm:$0xff]
    %v455 = vld [vmem:[#allocation6 + $0x540] sm:$0xff]
    %v456 = vld [vmem:[#allocation6 + $0x548] sm:$0xff]
    %v457 = vld [vmem:[#allocation6 + $0x550] sm:$0xff]
    %v458 = vld [vmem:[#allocation6 + $0x558] sm:$0xff]
    %v459 = vld [vmem:[#allocation6 + $0x560] sm:$0xff]
    %v460 = vld [vmem:[#allocation6 + $0x568] sm:$0xff]
    %v461 = vld [vmem:[#allocation6 + $0x570] sm:$0xff]
    %v462 = vld [vmem:[#allocation6 + $0x578] sm:$0xff]
    %v463 = vld [vmem:[#allocation6 + $0x580] sm:$0xff]
    %v464 = vld [vmem:[#allocation6 + $0x588] sm:$0xff]
    %v465 = vld [vmem:[#allocation6 + $0x590] sm:$0xff]
    %v466 = vld [vmem:[#allocation6 + $0x598] sm:$0xff]
    %v467 = vld [vmem:[#allocation6 + $0x5a0] sm:$0xff]
    %v468 = vld [vmem:[#allocation6 + $0x5a8] sm:$0xff]
    %v469 = vld [vmem:[#allocation6 + $0x5b0] sm:$0xff]
    %v470 = vld [vmem:[#allocation6 + $0x5b8] sm:$0xff]
    %v471 = vld [vmem:[#allocation6 + $0x5c0] sm:$0xff]
    %v472 = vld [vmem:[#allocation6 + $0x5c8] sm:$0xff]
    %v473 = vld [vmem:[#allocation6 + $0x5d0] sm:$0xff]
    %v474 = vld [vmem:[#allocation6 + $0x5d8] sm:$0xff]
    %v475 = vld [vmem:[#allocation6 + $0x5e0] sm:$0xff]
    %v476 = vld [vmem:[#allocation6 + $0x5e8] sm:$0xff]
    %v477 = vld [vmem:[#allocation6 + $0x5f0] sm:$0xff]
    %v478 = vld [vmem:[#allocation6 + $0x5f8] sm:$0xff]
    %v479 = vld [vmem:[#allocation6 + $0x600] sm:$0xff]
    %v480 = vld [vmem:[#allocation6 + $0x608] sm:$0xff]
    %v481 = vld [vmem:[#allocation6 + $0x610] sm:$0xff]
    %v482 = vld [vmem:[#allocation6 + $0x618] sm:$0xff]
    %v483 = vld [vmem:[#allocation6 + $0x620] sm:$0xff]
    %v484 = vld [vmem:[#allocation6 + $0x628] sm:$0xff]
    %v485 = vld [vmem:[#allocation6 + $0x630] sm:$0xff]
    %v486 = vld [vmem:[#allocation6 + $0x638] sm:$0xff]
    %v487 = vld [vmem:[#allocation6 + $0x640] sm:$0xff]
    %v488 = vld [vmem:[#allocation6 + $0x648] sm:$0xff]
    %v489 = vld [vmem:[#allocation6 + $0x650] sm:$0xff]
    %v490 = vld [vmem:[#allocation6 + $0x658] sm:$0xff]
    %v491 = vld [vmem:[#allocation6 + $0x660] sm:$0xff]
    %v492 = vld [vmem:[#allocation6 + $0x668] sm:$0xff]
    %v493 = vld [vmem:[#allocation6 + $0x670] sm:$0xff]
    %v494 = vld [vmem:[#allocation6 + $0x678] sm:$0xff]
    %v495 = vld [vmem:[#allocation6 + $0x680] sm:$0xff]
    %v496 = vld [vmem:[#allocation6 + $0x688] sm:$0xff]
    %v497 = vld [vmem:[#allocation6 + $0x690] sm:$0xff]
    %v498 = vld [vmem:[#allocation6 + $0x698] sm:$0xff]
    %v499 = vld [vmem:[#allocation6 + $0x6a0] sm:$0xff]
    %v500 = vld [vmem:[#allocation6 + $0x6a8] sm:$0xff]
    %v501 = vld [vmem:[#allocation6 + $0x6b0] sm:$0xff]
    %v502 = vld [vmem:[#allocation6 + $0x6b8] sm:$0xff]
    %v503 = vld [vmem:[#allocation6 + $0x6c0] sm:$0xff]
    %v504 = vld [vmem:[#allocation6 + $0x6c8] sm:$0xff]
    %v505 = vld [vmem:[#allocation6 + $0x6d0] sm:$0xff]
    %v506 = vld [vmem:[#allocation6 + $0x6d8] sm:$0xff]
    %v507 = vld [vmem:[#allocation6 + $0x6e0] sm:$0xff]
    %v508 = vld [vmem:[#allocation6 + $0x6e8] sm:$0xff]
    %v509 = vld [vmem:[#allocation6 + $0x6f0] sm:$0xff]
    %v510 = vld [vmem:[#allocation6 + $0x6f8] sm:$0xff]
    %v511 = vld [vmem:[#allocation6 + $0x700] sm:$0xff]
    %v512 = vld [vmem:[#allocation6 + $0x708] sm:$0xff]
    %v513 = vld [vmem:[#allocation6 + $0x710] sm:$0xff]
    %v514 = vld [vmem:[#allocation6 + $0x718] sm:$0xff]
    %v515 = vld [vmem:[#allocation6 + $0x720] sm:$0xff]
    %v516 = vld [vmem:[#allocation6 + $0x728] sm:$0xff]
    %v517 = vld [vmem:[#allocation6 + $0x730] sm:$0xff]
    %v518 = vld [vmem:[#allocation6 + $0x738] sm:$0xff]
    %v519 = vld [vmem:[#allocation6 + $0x740] sm:$0xff]
    %v520 = vld [vmem:[#allocation6 + $0x748] sm:$0xff]
    %v521 = vld [vmem:[#allocation6 + $0x750] sm:$0xff]
    %v522 = vld [vmem:[#allocation6 + $0x758] sm:$0xff]
    %v523 = vld [vmem:[#allocation6 + $0x760] sm:$0xff]
    %v524 = vld [vmem:[#allocation6 + $0x768] sm:$0xff]
    %v525 = vld [vmem:[#allocation6 + $0x770] sm:$0xff]
    %v526 = vld [vmem:[#allocation6 + $0x778] sm:$0xff]
    %v527 = vld [vmem:[#allocation6 + $0x780] sm:$0xff]
    %v528 = vld [vmem:[#allocation6 + $0x788] sm:$0xff]
    %v529 = vld [vmem:[#allocation6 + $0x790] sm:$0xff]
    %v530 = vld [vmem:[#allocation6 + $0x798] sm:$0xff]
    %v531 = vld [vmem:[#allocation6 + $0x7a0] sm:$0xff]
    %v532 = vld [vmem:[#allocation6 + $0x7a8] sm:$0xff]
    %v533 = vld [vmem:[#allocation6 + $0x7b0] sm:$0xff]
    %v534 = vld [vmem:[#allocation6 + $0x7b8] sm:$0xff]
    %v535 = vld [vmem:[#allocation6 + $0x7c0] sm:$0xff]
    %v536 = vld [vmem:[#allocation6 + $0x7c8] sm:$0xff]
    %v537 = vld [vmem:[#allocation6 + $0x7d0] sm:$0xff]
    %v538 = vld [vmem:[#allocation6 + $0x7d8] sm:$0xff]
    %v539 = vld [vmem:[#allocation6 + $0x7e0] sm:$0xff]
    %v540 = vld [vmem:[#allocation6 + $0x7e8] sm:$0xff]
    %v541 = vld [vmem:[#allocation6 + $0x7f0] sm:$0xff]
    %v542 = vld [vmem:[#allocation6 + $0x7f8] sm:$0xff]
    %v543 = vld [vmem:[#allocation6 + $0x800] sm:$0xff]
    %v544 = vld [vmem:[#allocation6 + $0x808] sm:$0xff]
    %v545 = vld [vmem:[#allocation6 + $0x810] sm:$0xff]
    %v546 = vld [vmem:[#allocation6 + $0x818] sm:$0xff]
    %v547 = vld [vmem:[#allocation6 + $0x820] sm:$0xff]
    %v548 = vld [vmem:[#allocation6 + $0x828] sm:$0xff]
    %v549 = vld [vmem:[#allocation6 + $0x830] sm:$0xff]
    %v550 = vld [vmem:[#allocation6 + $0x838] sm:$0xff]
    %v551 = vld [vmem:[#allocation6 + $0x840] sm:$0xff]
    %v552 = vld [vmem:[#allocation6 + $0x848] sm:$0xff]
    %v553 = vld [vmem:[#allocation6 + $0x850] sm:$0xff]
    %v554 = vld [vmem:[#allocation6 + $0x858] sm:$0xff]
    %v555 = vld [vmem:[#allocation6 + $0x860] sm:$0xff]
    %v556 = vld [vmem:[#allocation6 + $0x868] sm:$0xff]
    %v557 = vld [vmem:[#allocation6 + $0x870] sm:$0xff]
    %v558 = vld [vmem:[#allocation6 + $0x878] sm:$0xff]
    %v559 = vld [vmem:[#allocation6 + $0x880] sm:$0xff]
    %v560 = vld [vmem:[#allocation6 + $0x888] sm:$0xff]
    %v561 = vld [vmem:[#allocation6 + $0x890] sm:$0xff]
    %v562 = vld [vmem:[#allocation6 + $0x898] sm:$0xff]
    %v563 = vld [vmem:[#allocation6 + $0x8a0] sm:$0xff]
    %v564 = vld [vmem:[#allocation6 + $0x8a8] sm:$0xff]
    %v565 = vld [vmem:[#allocation6 + $0x8b0] sm:$0xff]
    %v566 = vld [vmem:[#allocation6 + $0x8b8] sm:$0xff]
    %v567 = vld [vmem:[#allocation6 + $0x8c0] sm:$0xff]
    %v568 = vld [vmem:[#allocation6 + $0x8c8] sm:$0xff]
    %v569 = vld [vmem:[#allocation6 + $0x8d0] sm:$0xff]
    %v570 = vld [vmem:[#allocation6 + $0x8d8] sm:$0xff]
    %v571 = vld [vmem:[#allocation6 + $0x8e0] sm:$0xff]
    %v572 = vld [vmem:[#allocation6 + $0x8e8] sm:$0xff]
    %v573 = vld [vmem:[#allocation6 + $0x8f0] sm:$0xff]
    %v574 = vld [vmem:[#allocation6 + $0x8f8] sm:$0xff]
    %v575 = vld [vmem:[#allocation6 + $0x900] sm:$0xff]
    %v576 = vld [vmem:[#allocation6 + $0x908] sm:$0xff]
    %v577 = vld [vmem:[#allocation6 + $0x910] sm:$0xff]
    %v578 = vld [vmem:[#allocation6 + $0x918] sm:$0xff]
    %v579 = vld [vmem:[#allocation6 + $0x920] sm:$0xff]
    %v580 = vld [vmem:[#allocation6 + $0x928] sm:$0xff]
    %v581 = vld [vmem:[#allocation6 + $0x930] sm:$0xff]
    %v582 = vld [vmem:[#allocation6 + $0x938] sm:$0xff]
    %v583 = vld [vmem:[#allocation6 + $0x940] sm:$0xff]
    %v584 = vld [vmem:[#allocation6 + $0x948] sm:$0xff]
    %v585 = vld [vmem:[#allocation6 + $0x950] sm:$0xff]
    %v586 = vld [vmem:[#allocation6 + $0x958] sm:$0xff]
    %v587 = vld [vmem:[#allocation6 + $0x960] sm:$0xff]
    %v588 = vld [vmem:[#allocation6 + $0x968] sm:$0xff]
    %v589 = vld [vmem:[#allocation6 + $0x970] sm:$0xff]
    %v590 = vld [vmem:[#allocation6 + $0x978] sm:$0xff]
    %v591 = vld [vmem:[#allocation6 + $0x980] sm:$0xff]
    %v592 = vld [vmem:[#allocation6 + $0x988] sm:$0xff]
    %v593 = vld [vmem:[#allocation6 + $0x990] sm:$0xff]
    %v594 = vld [vmem:[#allocation6 + $0x998] sm:$0xff]
    %v595 = vld [vmem:[#allocation6 + $0x9a0] sm:$0xff]
    %v596 = vld [vmem:[#allocation6 + $0x9a8] sm:$0xff]
    %v597 = vld [vmem:[#allocation6 + $0x9b0] sm:$0xff]
    %v598 = vld [vmem:[#allocation6 + $0x9b8] sm:$0xff]
    %v599 = vld [vmem:[#allocation6 + $0x9c0] sm:$0xff]
    %v600 = vld [vmem:[#allocation6 + $0x9c8] sm:$0xff]
    %v601 = vld [vmem:[#allocation6 + $0x9d0] sm:$0xff]
    %v602 = vld [vmem:[#allocation6 + $0x9d8] sm:$0xff]
    %v603 = vld [vmem:[#allocation6 + $0x9e0] sm:$0xff]
    %v604 = vld [vmem:[#allocation6 + $0x9e8] sm:$0xff]
    %v605 = vld [vmem:[#allocation6 + $0x9f0] sm:$0xff]
    %v606 = vld [vmem:[#allocation6 + $0x9f8] sm:$0xff]
    %v607 = vld [vmem:[#allocation6 + $0xa00] sm:$0xff]
    %v608 = vld [vmem:[#allocation6 + $0xa08] sm:$0xff]
    %v609 = vld [vmem:[#allocation6 + $0xa10] sm:$0xff]
    %v610 = vld [vmem:[#allocation6 + $0xa18] sm:$0xff]
    %v611 = vld [vmem:[#allocation6 + $0xa20] sm:$0xff]
    %v612 = vld [vmem:[#allocation6 + $0xa28] sm:$0xff]
    %v613 = vld [vmem:[#allocation6 + $0xa30] sm:$0xff]
    %v614 = vld [vmem:[#allocation6 + $0xa38] sm:$0xff]
    %v615 = vld [vmem:[#allocation6 + $0xa40] sm:$0xff]
    %v616 = vld [vmem:[#allocation6 + $0xa48] sm:$0xff]
    %v617 = vld [vmem:[#allocation6 + $0xa50] sm:$0xff]
    %v618 = vld [vmem:[#allocation6 + $0xa58] sm:$0xff]
    %v619 = vld [vmem:[#allocation6 + $0xa60] sm:$0xff]
    %v620 = vld [vmem:[#allocation6 + $0xa68] sm:$0xff]
    %v621 = vld [vmem:[#allocation6 + $0xa70] sm:$0xff]
    %v622 = vld [vmem:[#allocation6 + $0xa78] sm:$0xff]
    %v623 = vld [vmem:[#allocation6 + $0xa80] sm:$0xff]
    %v624 = vld [vmem:[#allocation6 + $0xa88] sm:$0xff]
    %v625 = vld [vmem:[#allocation6 + $0xa90] sm:$0xff]
    %v626 = vld [vmem:[#allocation6 + $0xa98] sm:$0xff]
    %v627 = vld [vmem:[#allocation6 + $0xaa0] sm:$0xff]
    %v628 = vld [vmem:[#allocation6 + $0xaa8] sm:$0xff]
    %v629 = vld [vmem:[#allocation6 + $0xab0] sm:$0xff]
    %v630 = vld [vmem:[#allocation6 + $0xab8] sm:$0xff]
    %v631 = vld [vmem:[#allocation6 + $0xac0] sm:$0xff]
    %v632 = vld [vmem:[#allocation6 + $0xac8] sm:$0xff]
    %v633 = vld [vmem:[#allocation6 + $0xad0] sm:$0xff]
    %v634 = vld [vmem:[#allocation6 + $0xad8] sm:$0xff]
    %v635 = vld [vmem:[#allocation6 + $0xae0] sm:$0xff]
    %v636 = vld [vmem:[#allocation6 + $0xae8] sm:$0xff]
    %v637 = vld [vmem:[#allocation6 + $0xaf0] sm:$0xff]
    %v638 = vld [vmem:[#allocation6 + $0xaf8] sm:$0xff]
    %v639 = vld [vmem:[#allocation6 + $0xb00] sm:$0xff]
    %v640 = vld [vmem:[#allocation6 + $0xb08] sm:$0xff]
    %v641 = vld [vmem:[#allocation6 + $0xb10] sm:$0xff]
    %v642 = vld [vmem:[#allocation6 + $0xb18] sm:$0xff]
    %v643 = vld [vmem:[#allocation6 + $0xb20] sm:$0xff]
    %v644 = vld [vmem:[#allocation6 + $0xb28] sm:$0xff]
    %v645 = vld [vmem:[#allocation6 + $0xb30] sm:$0xff]
    %v646 = vld [vmem:[#allocation6 + $0xb38] sm:$0xff]
    %v647 = vld [vmem:[#allocation6 + $0xb40] sm:$0xff]
    %v648 = vld [vmem:[#allocation6 + $0xb48] sm:$0xff]
    %v649 = vld [vmem:[#allocation6 + $0xb50] sm:$0xff]
    %v650 = vld [vmem:[#allocation6 + $0xb58] sm:$0xff]
    %v651 = vld [vmem:[#allocation6 + $0xb60] sm:$0xff]
    %v652 = vld [vmem:[#allocation6 + $0xb68] sm:$0xff]
    %v653 = vld [vmem:[#allocation6 + $0xb70] sm:$0xff]
    %v654 = vld [vmem:[#allocation6 + $0xb78] sm:$0xff]
    %v655 = vld [vmem:[#allocation6 + $0xb80] sm:$0xff]
    %v656 = vld [vmem:[#allocation6 + $0xb88] sm:$0xff]
    %v657 = vld [vmem:[#allocation6 + $0xb90] sm:$0xff]
    %v658 = vld [vmem:[#allocation6 + $0xb98] sm:$0xff]
    %v659 = vld [vmem:[#allocation6 + $0xba0] sm:$0xff]
    %v660 = vld [vmem:[#allocation6 + $0xba8] sm:$0xff]
    %v661 = vld [vmem:[#allocation6 + $0xbb0] sm:$0xff]
    %v662 = vld [vmem:[#allocation6 + $0xbb8] sm:$0xff]
    %v663 = vld [vmem:[#allocation6 + $0xbc0] sm:$0xff]
    %v664 = vld [vmem:[#allocation6 + $0xbc8] sm:$0xff]
    %v666 = vsel %vm136, %v254, 0
    %v669 = vsel %vm136, %v258, 0
    %v672 = vsel %vm136, %v262, 0
    %v675 = vsel %vm136, %v266, 0
    %v678 = vsel %vm136, %v270, 0
    %v681 = vsel %vm136, %v274, 0
    %v684 = vsel %vm136, %v278, 0
    %v687 = vsel %vm136, %v282, 0
    %v690 = vsel %vm136, %v286, 0
    %692 = vmatprep.subr.mxu0 %v288
    %693 = vmatpush1.msra.mxu0 %v287
    %694 = vmatprep.subr.mxu0 %v295
    %695 = vmatpush1.msra.mxu0 %v294
    %696 = vmatprep.subr.mxu0 %v302
    %697 = vmatpush1.msra.mxu0 %v301
    %698 = vmatprep.subr.mxu0 %v309
    %699 = vmatpush1.msra.mxu0 %v308
    %700 = vmatprep.subr.mxu0 %v316
    %701 = vmatpush1.msra.mxu0 %v315
    %702 = vmatprep.subr.mxu0 %v323
    %703 = vmatpush1.msra.mxu0 %v322
    %704 = vmatprep.subr.mxu0 %v330
    %705 = vmatpush1.msra.mxu0 %v329
    %706 = vmatprep.subr.mxu0 %v337
    %707 = vmatpush1.msra.mxu0 %v336
    %708 = vmatprep.subr.mxu0 %v344
    %709 = vmatpush1.msra.mxu0 %v343
    %710 = vmatprep.subr.mxu0 %v351
    %711 = vmatpush1.msra.mxu0 %v350
    %712 = vmatprep.subr.mxu0 %v358
    %713 = vmatpush1.msra.mxu0 %v357
    %714 = vmatprep.subr.mxu0 %v365
    %715 = vmatpush1.msra.mxu0 %v364
    %716 = vmatprep.subr.mxu0 %v372
    %717 = vmatpush1.msra.mxu0 %v371
    %718 = vmatprep.subr.mxu0 %v379
    %719 = vmatpush1.msra.mxu0 %v378
    %720 = vmatprep.subr.mxu0 %v386
    %721 = vmatpush1.msra.mxu0 %v385
    %722 = vmatprep.subr.mxu0 %v393
    %723 = vmatpush1.msra.mxu0 %v392
    %724 = vmatprep.subr.mxu0 %v400
    %725 = vmatpush1.msra.mxu0 %v399
    %726 = vmatprep.subr.mxu0 %v407
    %727 = vmatpush1.msra.mxu0 %v406
    %728 = vmatprep.subr.mxu0 %v414
    %729 = vmatpush1.msra.mxu0 %v413
    %730 = vmatprep.subr.mxu0 %v421
    %731 = vmatpush1.msra.mxu0 %v420
    %732 = vmatprep.subr.mxu0 %v428
    %733 = vmatpush1.msra.mxu0 %v427
    %734 = vmatprep.subr.mxu0 %v435
    %735 = vmatpush1.msra.mxu0 %v434
    %736 = vmatprep.subr.mxu0 %v442
    %737 = vmatpush1.msra.mxu0 %v441
    %738 = vmatprep.subr.mxu0 %v449
    %739 = vmatpush1.msra.mxu0 %v448
    %740 = vmatprep.subr.mxu0 %v456
    %741 = vmatpush1.msra.mxu0 %v455
    %742 = vmatprep.subr.mxu0 %v463
    %743 = vmatpush1.msra.mxu0 %v462
    %744 = vmatprep.subr.mxu0 %v470
    %745 = vmatpush1.msra.mxu0 %v469
    %746 = vmatprep.subr.mxu0 %v477
    %747 = vmatpush1.msra.mxu0 %v476
    %748 = vmatprep.subr.mxu0 %v484
    %749 = vmatpush1.msra.mxu0 %v483
    %750 = vmatprep.subr.mxu0 %v491
    %751 = vmatpush1.msra.mxu0 %v490
    %752 = vmatprep.subr.mxu0 %v498
    %753 = vmatpush1.msra.mxu0 %v497
    %754 = vmatprep.subr.mxu0 %v505
    %755 = vmatpush1.msra.mxu0 %v504
    %756 = vmatprep.mubr.f32.mxu0 %v252
    %757 = vmatmul.mubr.f32.gmra.mrb[0].mxu0 %v251
    %v758 = vpop.f32.mrb[0].mxu0
    %v759 = vadd.f32 0.0, %v758
    %v760 = vpop.f32.mrb[0].mxu0
    %v761 = vadd.f32 0.0, %v760
    %762 = vmatprep.mubr.f32.mxu0 %v256
    %763 = vmatmul.mubr.f32.gmra.mrb[0].mxu0 %v255
    %v764 = vpop.f32.mrb[0].mxu0
    %v765 = vadd.f32 0.0, %v764
    %v766 = vpop.f32.mrb[0].mxu0
    %v767 = vadd.f32 0.0, %v766
    %768 = vmatprep.mubr.f32.mxu0 %v260
    %769 = vmatmul.mubr.f32.gmra.mrb[0].mxu0 %v259
    %v770 = vpop.f32.mrb[0].mxu0
    %v771 = vadd.f32 0.0, %v770
    %v772 = vpop.f32.mrb[0].mxu0
    %v773 = vadd.f32 0.0, %v772
    %774 = vmatprep.mubr.f32.mxu0 %v264
    %775 = vmatmul.mubr.f32.gmra.mrb[0].mxu0 %v263
    %v776 = vpop.f32.mrb[0].mxu0
    %v777 = vadd.f32 0.0, %v776
    %v778 = vpop.f32.mrb[0].mxu0
    %v779 = vadd.f32 0.0, %v778
    %780 = vmatprep.mubr.f32.mxu0 %v268
    %781 = vmatmul.mubr.f32.gmra.mrb[0].mxu0 %v267
    %v782 = vpop.f32.mrb[0].mxu0
    %v783 = vadd.f32 0.0, %v782
    %v784 = vpop.f32.mrb[0].mxu0
    %v785 = vadd.f32 0.0, %v784
    %786 = vmatprep.mubr.f32.mxu0 %v272
    %787 = vmatmul.mubr.f32.gmra.mrb[0].mxu0 %v271
    %v788 = vpop.f32.mrb[0].mxu0
    %v789 = vadd.f32 0.0, %v788
    %v790 = vpop.f32.mrb[0].mxu0
    %v791 = vadd.f32 0.0, %v790
    %792 = vmatprep.mubr.f32.mxu0 %v276
    %793 = vmatmul.mubr.f32.gmra.mrb[0].mxu0 %v275
    %v794 = vpop.f32.mrb[0].mxu0
    %v795 = vadd.f32 0.0, %v794
    %v796 = vpop.f32.mrb[0].mxu0
    %v797 = vadd.f32 0.0, %v796
    %798 = vmatprep.mubr.f32.mxu0 %v280
    %799 = vmatmul.mubr.f32.gmra.mrb[0].mxu0 %v279
    %v800 = vpop.f32.mrb[0].mxu0
    %v801 = vadd.f32 0.0, %v800
    %v802 = vpop.f32.mrb[0].mxu0
    %v803 = vadd.f32 0.0, %v802
    %804 = vmatprep.mubr.f32.mxu0 %v284
    %805 = vmatmul.mubr.f32.gmra.mrb[0].mxu0 %v283
    %v806 = vpop.f32.mrb[0].mxu0
    %v807 = vadd.f32 0.0, %v806
    %v808 = vpop.f32.mrb[0].mxu0
    %v809 = vadd.f32 0.0, %v808
    %810 = vdwg.mxu0
    %811 = vmatprep.subr.mxu0 %v512
    %812 = vmatpush1.msra.mxu0 %v511
    %813 = vmatprep.subr.mxu0 %v519
    %814 = vmatpush1.msra.mxu0 %v518
    %815 = vmatprep.subr.mxu0 %v526
    %816 = vmatpush1.msra.mxu0 %v525
    %817 = vmatprep.subr.mxu0 %v533
    %818 = vmatpush1.msra.mxu0 %v532
    %819 = vmatprep.subr.mxu0 %v540
    %820 = vmatpush1.msra.mxu0 %v539
    %821 = vmatprep.subr.mxu0 %v547
    %822 = vmatpush1.msra.mxu0 %v546
    %823 = vmatprep.subr.mxu0 %v554
    %824 = vmatpush1.msra.mxu0 %v553
    %825 = vmatprep.subr.mxu0 %v561
    %826 = vmatpush1.msra.mxu0 %v560
    %827 = vmatprep.subr.mxu0 %v568
    %828 = vmatpush1.msra.mxu0 %v567
    %829 = vmatprep.subr.mxu0 %v575
    %830 = vmatpush1.msra.mxu0 %v574
    %831 = vmatprep.subr.mxu0 %v582
    %832 = vmatpush1.msra.mxu0 %v581
    %833 = vmatprep.subr.mxu0 %v589
    %834 = vmatpush1.msra.mxu0 %v588
    %835 = vmatprep.subr.mxu0 %v596
    %836 = vmatpush1.msra.mxu0 %v595
    %837 = vmatprep.subr.mxu0 %v603
    %838 = vmatpush1.msra.mxu0 %v602
    %839 = vmatprep.subr.mxu0 %v610
    %840 = vmatpush1.msra.mxu0 %v609
    %841 = vmatprep.subr.mxu0 %v617
    %842 = vmatpush1.msra.mxu0 %v616
    %843 = vmatprep.subr.mxu0 %v624
    %844 = vmatpush1.msra.mxu0 %v623
    %845 = vmatprep.subr.mxu0 %v631
    %846 = vmatpush1.msra.mxu0 %v630
    %847 = vmatprep.subr.mxu0 %v638
    %848 = vmatpush1.msra.mxu0 %v637
    %849 = vmatprep.subr.mxu0 %v645
    %850 = vmatpush1.msra.mxu0 %v644
    %851 = vmatprep.subr.mxu0 %v652
    %852 = vmatpush1.msra.mxu0 %v651
    %853 = vmatprep.subr.mxu0 %v659
    %854 = vmatpush1.msra.mxu0 %v658
    %855 = vmatprep.subr.mxu0 0.0
    %856 = vmatpush1.msra.mxu0 0.0
    %857 = vmatprep.subr.mxu0 0.0
    %858 = vmatpush1.msra.mxu0 0.0
    %859 = vmatprep.subr.mxu0 0.0
    %860 = vmatpush1.msra.mxu0 0.0
    %861 = vmatprep.subr.mxu0 0.0
    %862 = vmatpush1.msra.mxu0 0.0
    %863 = vmatprep.subr.mxu0 0.0
    %864 = vmatpush1.msra.mxu0 0.0
    %865 = vmatprep.subr.mxu0 0.0
    %866 = vmatpush1.msra.mxu0 0.0
    %867 = vmatprep.subr.mxu0 0.0
    %868 = vmatpush1.msra.mxu0 0.0
    %869 = vmatprep.subr.mxu0 0.0
    %870 = vmatpush1.msra.mxu0 0.0
    %871 = vmatprep.subr.mxu0 0.0
    %872 = vmatpush1.msra.mxu0 0.0
    %873 = vmatprep.subr.mxu0 0.0
    %874 = vmatpush1.msra.mxu0 0.0
    %875 = vmatprep.mubr.f32.mxu0 %v666
    %876 = vmatmul.mubr.f32.gmra.mrb[0].mxu0 %v253
    %v877 = vpop.f32.mrb[0].mxu0
    %v878 = vadd.f32 %v759, %v877
    %v879 = vpop.f32.mrb[0].mxu0
    %v880 = vadd.f32 %v761, %v879
    %881 = vmatprep.mubr.f32.mxu0 %v669
    %882 = vmatmul.mubr.f32.gmra.mrb[0].mxu0 %v257
    %v883 = vpop.f32.mrb[0].mxu0
    %v884 = vadd.f32 %v765, %v883
    %v885 = vpop.f32.mrb[0].mxu0
    %v886 = vadd.f32 %v767, %v885
    %887 = vmatprep.mubr.f32.mxu0 %v672
    %888 = vmatmul.mubr.f32.gmra.mrb[0].mxu0 %v261
    %v889 = vpop.f32.mrb[0].mxu0
    %v890 = vadd.f32 %v771, %v889
    %v891 = vpop.f32.mrb[0].mxu0
    %v892 = vadd.f32 %v773, %v891
    %893 = vmatprep.mubr.f32.mxu0 %v675
    %894 = vmatmul.mubr.f32.gmra.mrb[0].mxu0 %v265
    %v895 = vpop.f32.mrb[0].mxu0
    %v896 = vadd.f32 %v777, %v895
    %v897 = vpop.f32.mrb[0].mxu0
    %v898 = vadd.f32 %v779, %v897
    %899 = vmatprep.mubr.f32.mxu0 %v678
    %900 = vmatmul.mubr.f32.gmra.mrb[0].mxu0 %v269
    %v901 = vpop.f32.mrb[0].mxu0
    %v902 = vadd.f32 %v783, %v901
    %v903 = vpop.f32.mrb[0].mxu0
    %v904 = vadd.f32 %v785, %v903
    %905 = vmatprep.mubr.f32.mxu0 %v681
    %906 = vmatmul.mubr.f32.gmra.mrb[0].mxu0 %v273
    %v907 = vpop.f32.mrb[0].mxu0
    %v908 = vadd.f32 %v789, %v907
    %v909 = vpop.f32.mrb[0].mxu0
    %v910 = vadd.f32 %v791, %v909
    %911 = vmatprep.mubr.f32.mxu0 %v684
    %912 = vmatmul.mubr.f32.gmra.mrb[0].mxu0 %v277
    %v913 = vpop.f32.mrb[0].mxu0
    %v914 = vadd.f32 %v795, %v913
    %v915 = vpop.f32.mrb[0].mxu0
    %v916 = vadd.f32 %v797, %v915
    %917 = vmatprep.mubr.f32.mxu0 %v687
    %918 = vmatmul.mubr.f32.gmra.mrb[0].mxu0 %v281
    %v919 = vpop.f32.mrb[0].mxu0
    %v920 = vadd.f32 %v801, %v919
    %v921 = vpop.f32.mrb[0].mxu0
    %v922 = vadd.f32 %v803, %v921
    %923 = vmatprep.mubr.f32.mxu0 %v690
    %924 = vmatmul.mubr.f32.gmra.mrb[0].mxu0 %v285
    %v925 = vpop.f32.mrb[0].mxu0
    %v926 = vadd.f32 %v807, %v925
    %v927 = vpop.f32.mrb[0].mxu0
    %v928 = vadd.f32 %v809, %v927
    %929 = vdwg.mxu0
    %930 = vmatprep.subr.mxu0 %v290
    %931 = vmatpush1.msra.mxu0 %v289
    %932 = vmatprep.subr.mxu0 %v297
    %933 = vmatpush1.msra.mxu0 %v296
    %934 = vmatprep.subr.mxu0 %v304
    %935 = vmatpush1.msra.mxu0 %v303
    %936 = vmatprep.subr.mxu0 %v311
    %937 = vmatpush1.msra.mxu0 %v310
    %938 = vmatprep.subr.mxu0 %v318
    %939 = vmatpush1.msra.mxu0 %v317
    %940 = vmatprep.subr.mxu0 %v325
    %941 = vmatpush1.msra.mxu0 %v324
    %942 = vmatprep.subr.mxu0 %v332
    %943 = vmatpush1.msra.mxu0 %v331
    %944 = vmatprep.subr.mxu0 %v339
    %945 = vmatpush1.msra.mxu0 %v338
    %946 = vmatprep.subr.mxu0 %v346
    %947 = vmatpush1.msra.mxu0 %v345
    %948 = vmatprep.subr.mxu0 %v353
    %949 = vmatpush1.msra.mxu0 %v352
    %950 = vmatprep.subr.mxu0 %v360
    %951 = vmatpush1.msra.mxu0 %v359
    %952 = vmatprep.subr.mxu0 %v367
    %953 = vmatpush1.msra.mxu0 %v366
    %954 = vmatprep.subr.mxu0 %v374
    %955 = vmatpush1.msra.mxu0 %v373
    %956 = vmatprep.subr.mxu0 %v381
    %957 = vmatpush1.msra.mxu0 %v380
    %958 = vmatprep.subr.mxu0 %v388
    %959 = vmatpush1.msra.mxu0 %v387
    %960 = vmatprep.subr.mxu0 %v395
    %961 = vmatpush1.msra.mxu0 %v394
    %962 = vmatprep.subr.mxu0 %v402
    %963 = vmatpush1.msra.mxu0 %v401
    %964 = vmatprep.subr.mxu0 %v409
    %965 = vmatpush1.msra.mxu0 %v408
    %966 = vmatprep.subr.mxu0 %v416
    %967 = vmatpush1.msra.mxu0 %v415
    %968 = vmatprep.subr.mxu0 %v423
    %969 = vmatpush1.msra.mxu0 %v422
    %970 = vmatprep.subr.mxu0 %v430
    %971 = vmatpush1.msra.mxu0 %v429
    %972 = vmatprep.subr.mxu0 %v437
    %973 = vmatpush1.msra.mxu0 %v436
    %974 = vmatprep.subr.mxu0 %v444
    %975 = vmatpush1.msra.mxu0 %v443
    %976 = vmatprep.subr.mxu0 %v451
    %977 = vmatpush1.msra.mxu0 %v450
    %978 = vmatprep.subr.mxu0 %v458
    %979 = vmatpush1.msra.mxu0 %v457
    %980 = vmatprep.subr.mxu0 %v465
    %981 = vmatpush1.msra.mxu0 %v464
    %982 = vmatprep.subr.mxu0 %v472
    %983 = vmatpush1.msra.mxu0 %v471
    %984 = vmatprep.subr.mxu0 %v479
    %985 = vmatpush1.msra.mxu0 %v478
    %986 = vmatprep.subr.mxu0 %v486
    %987 = vmatpush1.msra.mxu0 %v485
    %988 = vmatprep.subr.mxu0 %v493
    %989 = vmatpush1.msra.mxu0 %v492
    %990 = vmatprep.subr.mxu0 %v500
    %991 = vmatpush1.msra.mxu0 %v499
    %992 = vmatprep.subr.mxu0 %v507
    %993 = vmatpush1.msra.mxu0 %v506
    %994 = vmatprep.mubr.f32.mxu0 %v252
    %995 = vmatmul.mubr.f32.gmra.mrb[0].mxu0 %v251
    %v996 = vpop.f32.mrb[0].mxu0
    %v997 = vadd.f32 0.0, %v996
    %v998 = vpop.f32.mrb[0].mxu0
    %v999 = vadd.f32 0.0, %v998
    %1000 = vmatprep.mubr.f32.mxu0 %v256
    %1001 = vmatmul.mubr.f32.gmra.mrb[0].mxu0 %v255
    %v1002 = vpop.f32.mrb[0].mxu0
    %v1003 = vadd.f32 0.0, %v1002
    %v1004 = vpop.f32.mrb[0].mxu0
    %v1005 = vadd.f32 0.0, %v1004
    %1006 = vmatprep.mubr.f32.mxu0 %v260
    %1007 = vmatmul.mubr.f32.gmra.mrb[0].mxu0 %v259
    %v1008 = vpop.f32.mrb[0].mxu0
    %v1009 = vadd.f32 0.0, %v1008
    %v1010 = vpop.f32.mrb[0].mxu0
    %v1011 = vadd.f32 0.0, %v1010
    %1012 = vmatprep.mubr.f32.mxu0 %v264
    %1013 = vmatmul.mubr.f32.gmra.mrb[0].mxu0 %v263
    %v1014 = vpop.f32.mrb[0].mxu0
    %v1015 = vadd.f32 0.0, %v1014
    %v1016 = vpop.f32.mrb[0].mxu0
    %v1017 = vadd.f32 0.0, %v1016
    %1018 = vmatprep.mubr.f32.mxu0 %v268
    %1019 = vmatmul.mubr.f32.gmra.mrb[0].mxu0 %v267
    %v1020 = vpop.f32.mrb[0].mxu0
    %v1021 = vadd.f32 0.0, %v1020
    %v1022 = vpop.f32.mrb[0].mxu0
    %v1023 = vadd.f32 0.0, %v1022
    %1024 = vmatprep.mubr.f32.mxu0 %v272
    %1025 = vmatmul.mubr.f32.gmra.mrb[0].mxu0 %v271
    %v1026 = vpop.f32.mrb[0].mxu0
    %v1027 = vadd.f32 0.0, %v1026
    %v1028 = vpop.f32.mrb[0].mxu0
    %v1029 = vadd.f32 0.0, %v1028
    %1030 = vmatprep.mubr.f32.mxu0 %v276
    %1031 = vmatmul.mubr.f32.gmra.mrb[0].mxu0 %v275
    %v1032 = vpop.f32.mrb[0].mxu0
    %v1033 = vadd.f32 0.0, %v1032
    %v1034 = vpop.f32.mrb[0].mxu0
    %v1035 = vadd.f32 0.0, %v1034
    %1036 = vmatprep.mubr.f32.mxu0 %v280
    %1037 = vmatmul.mubr.f32.gmra.mrb[0].mxu0 %v279
    %v1038 = vpop.f32.mrb[0].mxu0
    %v1039 = vadd.f32 0.0, %v1038
    %v1040 = vpop.f32.mrb[0].mxu0
    %v1041 = vadd.f32 0.0, %v1040
    %1042 = vmatprep.mubr.f32.mxu0 %v284
    %1043 = vmatmul.mubr.f32.gmra.mrb[0].mxu0 %v283
    %v1044 = vpop.f32.mrb[0].mxu0
    %v1045 = vadd.f32 0.0, %v1044
    %v1046 = vpop.f32.mrb[0].mxu0
    %v1047 = vadd.f32 0.0, %v1046
    %1048 = vdwg.mxu0
    %1049 = vmatprep.subr.mxu0 %v514
    %1050 = vmatpush1.msra.mxu0 %v513
    %1051 = vmatprep.subr.mxu0 %v521
    %1052 = vmatpush1.msra.mxu0 %v520
    %1053 = vmatprep.subr.mxu0 %v528
    %1054 = vmatpush1.msra.mxu0 %v527
    %1055 = vmatprep.subr.mxu0 %v535
    %1056 = vmatpush1.msra.mxu0 %v534
    %1057 = vmatprep.subr.mxu0 %v542
    %1058 = vmatpush1.msra.mxu0 %v541
    %1059 = vmatprep.subr.mxu0 %v549
    %1060 = vmatpush1.msra.mxu0 %v548
    %1061 = vmatprep.subr.mxu0 %v556
    %1062 = vmatpush1.msra.mxu0 %v555
    %1063 = vmatprep.subr.mxu0 %v563
    %1064 = vmatpush1.msra.mxu0 %v562
    %1065 = vmatprep.subr.mxu0 %v570
    %1066 = vmatpush1.msra.mxu0 %v569
    %1067 = vmatprep.subr.mxu0 %v577
    %1068 = vmatpush1.msra.mxu0 %v576
    %1069 = vmatprep.subr.mxu0 %v584
    %1070 = vmatpush1.msra.mxu0 %v583
    %1071 = vmatprep.subr.mxu0 %v591
    %1072 = vmatpush1.msra.mxu0 %v590
    %1073 = vmatprep.subr.mxu0 %v598
    %1074 = vmatpush1.msra.mxu0 %v597
    %1075 = vmatprep.subr.mxu0 %v605
    %1076 = vmatpush1.msra.mxu0 %v604
    %1077 = vmatprep.subr.mxu0 %v612
    %1078 = vmatpush1.msra.mxu0 %v611
    %1079 = vmatprep.subr.mxu0 %v619
    %1080 = vmatpush1.msra.mxu0 %v618
    %1081 = vmatprep.subr.mxu0 %v626
    %1082 = vmatpush1.msra.mxu0 %v625
    %1083 = vmatprep.subr.mxu0 %v633
    %1084 = vmatpush1.msra.mxu0 %v632
    %1085 = vmatprep.subr.mxu0 %v640
    %1086 = vmatpush1.msra.mxu0 %v639
    %1087 = vmatprep.subr.mxu0 %v647
    %1088 = vmatpush1.msra.mxu0 %v646
    %1089 = vmatprep.subr.mxu0 %v654
    %1090 = vmatpush1.msra.mxu0 %v653
    %1091 = vmatprep.subr.mxu0 %v661
    %1092 = vmatpush1.msra.mxu0 %v660
    %1093 = vmatprep.subr.mxu0 0.0
    %1094 = vmatpush1.msra.mxu0 0.0
    %1095 = vmatprep.subr.mxu0 0.0
    %1096 = vmatpush1.msra.mxu0 0.0
    %1097 = vmatprep.subr.mxu0 0.0
    %1098 = vmatpush1.msra.mxu0 0.0
    %1099 = vmatprep.subr.mxu0 0.0
    %1100 = vmatpush1.msra.mxu0 0.0
    %1101 = vmatprep.subr.mxu0 0.0
    %1102 = vmatpush1.msra.mxu0 0.0
    %1103 = vmatprep.subr.mxu0 0.0
    %1104 = vmatpush1.msra.mxu0 0.0
    %1105 = vmatprep.subr.mxu0 0.0
    %1106 = vmatpush1.msra.mxu0 0.0
    %1107 = vmatprep.subr.mxu0 0.0
    %1108 = vmatpush1.msra.mxu0 0.0
    %1109 = vmatprep.subr.mxu0 0.0
    %1110 = vmatpush1.msra.mxu0 0.0
    %1111 = vmatprep.subr.mxu0 0.0
    %1112 = vmatpush1.msra.mxu0 0.0
    %1113 = vmatprep.mubr.f32.mxu0 %v666
    %1114 = vmatmul.mubr.f32.gmra.mrb[0].mxu0 %v253
    %v1115 = vpop.f32.mrb[0].mxu0
    %v1116 = vadd.f32 %v997, %v1115
    %v1117 = vpop.f32.mrb[0].mxu0
    %v1118 = vadd.f32 %v999, %v1117
    %1119 = vmatprep.mubr.f32.mxu0 %v669
    %1120 = vmatmul.mubr.f32.gmra.mrb[0].mxu0 %v257
    %v1121 = vpop.f32.mrb[0].mxu0
    %v1122 = vadd.f32 %v1003, %v1121
    %v1123 = vpop.f32.mrb[0].mxu0
    %v1124 = vadd.f32 %v1005, %v1123
    %1125 = vmatprep.mubr.f32.mxu0 %v672
    %1126 = vmatmul.mubr.f32.gmra.mrb[0].mxu0 %v261
    %v1127 = vpop.f32.mrb[0].mxu0
    %v1128 = vadd.f32 %v1009, %v1127
    %v1129 = vpop.f32.mrb[0].mxu0
    %v1130 = vadd.f32 %v1011, %v1129
    %1131 = vmatprep.mubr.f32.mxu0 %v675
    %1132 = vmatmul.mubr.f32.gmra.mrb[0].mxu0 %v265
    %v1133 = vpop.f32.mrb[0].mxu0
    %v1134 = vadd.f32 %v1015, %v1133
    %v1135 = vpop.f32.mrb[0].mxu0
    %v1136 = vadd.f32 %v1017, %v1135
    %1137 = vmatprep.mubr.f32.mxu0 %v678
    %1138 = vmatmul.mubr.f32.gmra.mrb[0].mxu0 %v269
    %v1139 = vpop.f32.mrb[0].mxu0
    %v1140 = vadd.f32 %v1021, %v1139
    %v1141 = vpop.f32.mrb[0].mxu0
    %v1142 = vadd.f32 %v1023, %v1141
    %1143 = vmatprep.mubr.f32.mxu0 %v681
    %1144 = vmatmul.mubr.f32.gmra.mrb[0].mxu0 %v273
    %v1145 = vpop.f32.mrb[0].mxu0
    %v1146 = vadd.f32 %v1027, %v1145
    %v1147 = vpop.f32.mrb[0].mxu0
    %v1148 = vadd.f32 %v1029, %v1147
    %1149 = vmatprep.mubr.f32.mxu0 %v684
    %1150 = vmatmul.mubr.f32.gmra.mrb[0].mxu0 %v277
    %v1151 = vpop.f32.mrb[0].mxu0
    %v1152 = vadd.f32 %v1033, %v1151
    %v1153 = vpop.f32.mrb[0].mxu0
    %v1154 = vadd.f32 %v1035, %v1153
    %1155 = vmatprep.mubr.f32.mxu0 %v687
    %1156 = vmatmul.mubr.f32.gmra.mrb[0].mxu0 %v281
    %v1157 = vpop.f32.mrb[0].mxu0
    %v1158 = vadd.f32 %v1039, %v1157
    %v1159 = vpop.f32.mrb[0].mxu0
    %v1160 = vadd.f32 %v1041, %v1159
    %1161 = vmatprep.mubr.f32.mxu0 %v690
    %1162 = vmatmul.mubr.f32.gmra.mrb[0].mxu0 %v285
    %v1163 = vpop.f32.mrb[0].mxu0
    %v1164 = vadd.f32 %v1045, %v1163
    %v1165 = vpop.f32.mrb[0].mxu0
    %v1166 = vadd.f32 %v1047, %v1165
    %1167 = vdwg.mxu0
    %1168 = vmatprep.subr.mxu0 %v292
    %1169 = vmatpush1.msra.mxu0 %v291
    %1170 = vmatprep.subr.mxu0 %v299
    %1171 = vmatpush1.msra.mxu0 %v298
    %1172 = vmatprep.subr.mxu0 %v306
    %1173 = vmatpush1.msra.mxu0 %v305
    %1174 = vmatprep.subr.mxu0 %v313
    %1175 = vmatpush1.msra.mxu0 %v312
    %1176 = vmatprep.subr.mxu0 %v320
    %1177 = vmatpush1.msra.mxu0 %v319
    %1178 = vmatprep.subr.mxu0 %v327
    %1179 = vmatpush1.msra.mxu0 %v326
    %1180 = vmatprep.subr.mxu0 %v334
    %1181 = vmatpush1.msra.mxu0 %v333
    %1182 = vmatprep.subr.mxu0 %v341
    %1183 = vmatpush1.msra.mxu0 %v340
    %1184 = vmatprep.subr.mxu0 %v348
    %1185 = vmatpush1.msra.mxu0 %v347
    %1186 = vmatprep.subr.mxu0 %v355
    %1187 = vmatpush1.msra.mxu0 %v354
    %1188 = vmatprep.subr.mxu0 %v362
    %1189 = vmatpush1.msra.mxu0 %v361
    %1190 = vmatprep.subr.mxu0 %v369
    %1191 = vmatpush1.msra.mxu0 %v368
    %1192 = vmatprep.subr.mxu0 %v376
    %1193 = vmatpush1.msra.mxu0 %v375
    %1194 = vmatprep.subr.mxu0 %v383
    %1195 = vmatpush1.msra.mxu0 %v382
    %1196 = vmatprep.subr.mxu0 %v390
    %1197 = vmatpush1.msra.mxu0 %v389
    %1198 = vmatprep.subr.mxu0 %v397
    %1199 = vmatpush1.msra.mxu0 %v396
    %1200 = vmatprep.subr.mxu0 %v404
    %1201 = vmatpush1.msra.mxu0 %v403
    %1202 = vmatprep.subr.mxu0 %v411
    %1203 = vmatpush1.msra.mxu0 %v410
    %1204 = vmatprep.subr.mxu0 %v418
    %1205 = vmatpush1.msra.mxu0 %v417
    %1206 = vmatprep.subr.mxu0 %v425
    %1207 = vmatpush1.msra.mxu0 %v424
    %1208 = vmatprep.subr.mxu0 %v432
    %1209 = vmatpush1.msra.mxu0 %v431
    %1210 = vmatprep.subr.mxu0 %v439
    %1211 = vmatpush1.msra.mxu0 %v438
    %1212 = vmatprep.subr.mxu0 %v446
    %1213 = vmatpush1.msra.mxu0 %v445
    %1214 = vmatprep.subr.mxu0 %v453
    %1215 = vmatpush1.msra.mxu0 %v452
    %1216 = vmatprep.subr.mxu0 %v460
    %1217 = vmatpush1.msra.mxu0 %v459
    %1218 = vmatprep.subr.mxu0 %v467
    %1219 = vmatpush1.msra.mxu0 %v466
    %1220 = vmatprep.subr.mxu0 %v474
    %1221 = vmatpush1.msra.mxu0 %v473
    %1222 = vmatprep.subr.mxu0 %v481
    %1223 = vmatpush1.msra.mxu0 %v480
    %1224 = vmatprep.subr.mxu0 %v488
    %1225 = vmatpush1.msra.mxu0 %v487
    %1226 = vmatprep.subr.mxu0 %v495
    %1227 = vmatpush1.msra.mxu0 %v494
    %1228 = vmatprep.subr.mxu0 %v502
    %1229 = vmatpush1.msra.mxu0 %v501
    %1230 = vmatprep.subr.mxu0 %v509
    %1231 = vmatpush1.msra.mxu0 %v508
    %1232 = vmatprep.mubr.f32.mxu0 %v252
    %1233 = vmatmul.mubr.f32.gmra.mrb[0].mxu0 %v251
    %v1234 = vpop.f32.mrb[0].mxu0
    %v1235 = vadd.f32 0.0, %v1234
    %v1236 = vpop.f32.mrb[0].mxu0
    %v1237 = vadd.f32 0.0, %v1236
    %1238 = vmatprep.mubr.f32.mxu0 %v256
    %1239 = vmatmul.mubr.f32.gmra.mrb[0].mxu0 %v255
    %v1240 = vpop.f32.mrb[0].mxu0
    %v1241 = vadd.f32 0.0, %v1240
    %v1242 = vpop.f32.mrb[0].mxu0
    %v1243 = vadd.f32 0.0, %v1242
    %1244 = vmatprep.mubr.f32.mxu0 %v260
    %1245 = vmatmul.mubr.f32.gmra.mrb[0].mxu0 %v259
    %v1246 = vpop.f32.mrb[0].mxu0
    %v1247 = vadd.f32 0.0, %v1246
    %v1248 = vpop.f32.mrb[0].mxu0
    %v1249 = vadd.f32 0.0, %v1248
    %1250 = vmatprep.mubr.f32.mxu0 %v264
    %1251 = vmatmul.mubr.f32.gmra.mrb[0].mxu0 %v263
    %v1252 = vpop.f32.mrb[0].mxu0
    %v1253 = vadd.f32 0.0, %v1252
    %v1254 = vpop.f32.mrb[0].mxu0
    %v1255 = vadd.f32 0.0, %v1254
    %1256 = vmatprep.mubr.f32.mxu0 %v268
    %1257 = vmatmul.mubr.f32.gmra.mrb[0].mxu0 %v267
    %v1258 = vpop.f32.mrb[0].mxu0
    %v1259 = vadd.f32 0.0, %v1258
    %v1260 = vpop.f32.mrb[0].mxu0
    %v1261 = vadd.f32 0.0, %v1260
    %1262 = vmatprep.mubr.f32.mxu0 %v272
    %1263 = vmatmul.mubr.f32.gmra.mrb[0].mxu0 %v271
    %v1264 = vpop.f32.mrb[0].mxu0
    %v1265 = vadd.f32 0.0, %v1264
    %v1266 = vpop.f32.mrb[0].mxu0
    %v1267 = vadd.f32 0.0, %v1266
    %1268 = vmatprep.mubr.f32.mxu0 %v276
    %1269 = vmatmul.mubr.f32.gmra.mrb[0].mxu0 %v275
    %v1270 = vpop.f32.mrb[0].mxu0
    %v1271 = vadd.f32 0.0, %v1270
    %v1272 = vpop.f32.mrb[0].mxu0
    %v1273 = vadd.f32 0.0, %v1272
    %1274 = vmatprep.mubr.f32.mxu0 %v280
    %1275 = vmatmul.mubr.f32.gmra.mrb[0].mxu0 %v279
    %v1276 = vpop.f32.mrb[0].mxu0
    %v1277 = vadd.f32 0.0, %v1276
    %v1278 = vpop.f32.mrb[0].mxu0
    %v1279 = vadd.f32 0.0, %v1278
    %1280 = vmatprep.mubr.f32.mxu0 %v284
    %1281 = vmatmul.mubr.f32.gmra.mrb[0].mxu0 %v283
    %v1282 = vpop.f32.mrb[0].mxu0
    %v1283 = vadd.f32 0.0, %v1282
    %v1284 = vpop.f32.mrb[0].mxu0
    %v1285 = vadd.f32 0.0, %v1284
    %1286 = vdwg.mxu0
    %1287 = vmatprep.subr.mxu0 %v516
    %1288 = vmatpush1.msra.mxu0 %v515
    %1289 = vmatprep.subr.mxu0 %v523
    %1290 = vmatpush1.msra.mxu0 %v522
    %1291 = vmatprep.subr.mxu0 %v530
    %1292 = vmatpush1.msra.mxu0 %v529
    %1293 = vmatprep.subr.mxu0 %v537
    %1294 = vmatpush1.msra.mxu0 %v536
    %1295 = vmatprep.subr.mxu0 %v544
    %1296 = vmatpush1.msra.mxu0 %v543
    %1297 = vmatprep.subr.mxu0 %v551
    %1298 = vmatpush1.msra.mxu0 %v550
    %1299 = vmatprep.subr.mxu0 %v558
    %1300 = vmatpush1.msra.mxu0 %v557
    %1301 = vmatprep.subr.mxu0 %v565
    %1302 = vmatpush1.msra.mxu0 %v564
    %1303 = vmatprep.subr.mxu0 %v572
    %1304 = vmatpush1.msra.mxu0 %v571
    %1305 = vmatprep.subr.mxu0 %v579
    %1306 = vmatpush1.msra.mxu0 %v578
    %1307 = vmatprep.subr.mxu0 %v586
    %1308 = vmatpush1.msra.mxu0 %v585
    %1309 = vmatprep.subr.mxu0 %v593
    %1310 = vmatpush1.msra.mxu0 %v592
    %1311 = vmatprep.subr.mxu0 %v600
    %1312 = vmatpush1.msra.mxu0 %v599
    %1313 = vmatprep.subr.mxu0 %v607
    %1314 = vmatpush1.msra.mxu0 %v606
    %1315 = vmatprep.subr.mxu0 %v614
    %1316 = vmatpush1.msra.mxu0 %v613
    %1317 = vmatprep.subr.mxu0 %v621
    %1318 = vmatpush1.msra.mxu0 %v620
    %1319 = vmatprep.subr.mxu0 %v628
    %1320 = vmatpush1.msra.mxu0 %v627
    %1321 = vmatprep.subr.mxu0 %v635
    %1322 = vmatpush1.msra.mxu0 %v634
    %1323 = vmatprep.subr.mxu0 %v642
    %1324 = vmatpush1.msra.mxu0 %v641
    %1325 = vmatprep.subr.mxu0 %v649
    %1326 = vmatpush1.msra.mxu0 %v648
    %1327 = vmatprep.subr.mxu0 %v656
    %1328 = vmatpush1.msra.mxu0 %v655
    %1329 = vmatprep.subr.mxu0 %v663
    %1330 = vmatpush1.msra.mxu0 %v662
    %1331 = vmatprep.subr.mxu0 0.0
    %1332 = vmatpush1.msra.mxu0 0.0
    %1333 = vmatprep.subr.mxu0 0.0
    %1334 = vmatpush1.msra.mxu0 0.0
    %1335 = vmatprep.subr.mxu0 0.0
    %1336 = vmatpush1.msra.mxu0 0.0
    %1337 = vmatprep.subr.mxu0 0.0
    %1338 = vmatpush1.msra.mxu0 0.0
    %1339 = vmatprep.subr.mxu0 0.0
    %1340 = vmatpush1.msra.mxu0 0.0
    %1341 = vmatprep.subr.mxu0 0.0
    %1342 = vmatpush1.msra.mxu0 0.0
    %1343 = vmatprep.subr.mxu0 0.0
    %1344 = vmatpush1.msra.mxu0 0.0
    %1345 = vmatprep.subr.mxu0 0.0
    %1346 = vmatpush1.msra.mxu0 0.0
    %1347 = vmatprep.subr.mxu0 0.0
    %1348 = vmatpush1.msra.mxu0 0.0
    %1349 = vmatprep.subr.mxu0 0.0
    %1350 = vmatpush1.msra.mxu0 0.0
    %1351 = vmatprep.mubr.f32.mxu0 %v666
    %1352 = vmatmul.mubr.f32.gmra.mrb[0].mxu0 %v253
    %v1353 = vpop.f32.mrb[0].mxu0
    %v1354 = vadd.f32 %v1235, %v1353
    %v1355 = vpop.f32.mrb[0].mxu0
    %v1356 = vadd.f32 %v1237, %v1355
    %1357 = vmatprep.mubr.f32.mxu0 %v669
    %1358 = vmatmul.mubr.f32.gmra.mrb[0].mxu0 %v257
    %v1359 = vpop.f32.mrb[0].mxu0
    %v1360 = vadd.f32 %v1241, %v1359
    %v1361 = vpop.f32.mrb[0].mxu0
    %v1362 = vadd.f32 %v1243, %v1361
    %1363 = vmatprep.mubr.f32.mxu0 %v672
    %1364 = vmatmul.mubr.f32.gmra.mrb[0].mxu0 %v261
    %v1365 = vpop.f32.mrb[0].mxu0
    %v1366 = vadd.f32 %v1247, %v1365
    %v1367 = vpop.f32.mrb[0].mxu0
    %v1368 = vadd.f32 %v1249, %v1367
    %1369 = vmatprep.mubr.f32.mxu0 %v675
    %1370 = vmatmul.mubr.f32.gmra.mrb[0].mxu0 %v265
    %v1371 = vpop.f32.mrb[0].mxu0
    %v1372 = vadd.f32 %v1253, %v1371
    %v1373 = vpop.f32.mrb[0].mxu0
    %v1374 = vadd.f32 %v1255, %v1373
    %1375 = vmatprep.mubr.f32.mxu0 %v678
    %1376 = vmatmul.mubr.f32.gmra.mrb[0].mxu0 %v269
    %v1377 = vpop.f32.mrb[0].mxu0
    %v1378 = vadd.f32 %v1259, %v1377
    %v1379 = vpop.f32.mrb[0].mxu0
    %v1380 = vadd.f32 %v1261, %v1379
    %1381 = vmatprep.mubr.f32.mxu0 %v681
    %1382 = vmatmul.mubr.f32.gmra.mrb[0].mxu0 %v273
    %v1383 = vpop.f32.mrb[0].mxu0
    %v1384 = vadd.f32 %v1265, %v1383
    %v1385 = vpop.f32.mrb[0].mxu0
    %v1386 = vadd.f32 %v1267, %v1385
    %1387 = vmatprep.mubr.f32.mxu0 %v684
    %1388 = vmatmul.mubr.f32.gmra.mrb[0].mxu0 %v277
    %v1389 = vpop.f32.mrb[0].mxu0
    %v1390 = vadd.f32 %v1271, %v1389
    %v1391 = vpop.f32.mrb[0].mxu0
    %v1392 = vadd.f32 %v1273, %v1391
    %1393 = vmatprep.mubr.f32.mxu0 %v687
    %1394 = vmatmul.mubr.f32.gmra.mrb[0].mxu0 %v281
    %v1395 = vpop.f32.mrb[0].mxu0
    %v1396 = vadd.f32 %v1277, %v1395
    %v1397 = vpop.f32.mrb[0].mxu0
    %v1398 = vadd.f32 %v1279, %v1397
    %1399 = vmatprep.mubr.f32.mxu0 %v690
    %1400 = vmatmul.mubr.f32.gmra.mrb[0].mxu0 %v285
    %v1401 = vpop.f32.mrb[0].mxu0
    %v1402 = vadd.f32 %v1283, %v1401
    %v1403 = vpop.f32.mrb[0].mxu0
    %v1404 = vadd.f32 %v1285, %v1403
    %1405 = vdwg.mxu0
    %1406 = vmatprep.subr.mxu0 0.0
    %1407 = vmatpush1.msra.mxu0 %v293
    %1408 = vmatprep.subr.mxu0 0.0
    %1409 = vmatpush1.msra.mxu0 %v300
    %1410 = vmatprep.subr.mxu0 0.0
    %1411 = vmatpush1.msra.mxu0 %v307
    %1412 = vmatprep.subr.mxu0 0.0
    %1413 = vmatpush1.msra.mxu0 %v314
    %1414 = vmatprep.subr.mxu0 0.0
    %1415 = vmatpush1.msra.mxu0 %v321
    %1416 = vmatprep.subr.mxu0 0.0
    %1417 = vmatpush1.msra.mxu0 %v328
    %1418 = vmatprep.subr.mxu0 0.0
    %1419 = vmatpush1.msra.mxu0 %v335
    %1420 = vmatprep.subr.mxu0 0.0
    %1421 = vmatpush1.msra.mxu0 %v342
    %1422 = vmatprep.subr.mxu0 0.0
    %1423 = vmatpush1.msra.mxu0 %v349
    %1424 = vmatprep.subr.mxu0 0.0
    %1425 = vmatpush1.msra.mxu0 %v356
    %1426 = vmatprep.subr.mxu0 0.0
    %1427 = vmatpush1.msra.mxu0 %v363
    %1428 = vmatprep.subr.mxu0 0.0
    %1429 = vmatpush1.msra.mxu0 %v370
    %1430 = vmatprep.subr.mxu0 0.0
    %1431 = vmatpush1.msra.mxu0 %v377
    %1432 = vmatprep.subr.mxu0 0.0
    %1433 = vmatpush1.msra.mxu0 %v384
    %1434 = vmatprep.subr.mxu0 0.0
    %1435 = vmatpush1.msra.mxu0 %v391
    %1436 = vmatprep.subr.mxu0 0.0
    %1437 = vmatpush1.msra.mxu0 %v398
    %1438 = vmatprep.subr.mxu0 0.0
    %1439 = vmatpush1.msra.mxu0 %v405
    %1440 = vmatprep.subr.mxu0 0.0
    %1441 = vmatpush1.msra.mxu0 %v412
    %1442 = vmatprep.subr.mxu0 0.0
    %1443 = vmatpush1.msra.mxu0 %v419
    %1444 = vmatprep.subr.mxu0 0.0
    %1445 = vmatpush1.msra.mxu0 %v426
    %1446 = vmatprep.subr.mxu0 0.0
    %1447 = vmatpush1.msra.mxu0 %v433
    %1448 = vmatprep.subr.mxu0 0.0
    %1449 = vmatpush1.msra.mxu0 %v440
    %1450 = vmatprep.subr.mxu0 0.0
    %1451 = vmatpush1.msra.mxu0 %v447
    %1452 = vmatprep.subr.mxu0 0.0
    %1453 = vmatpush1.msra.mxu0 %v454
    %1454 = vmatprep.subr.mxu0 0.0
    %1455 = vmatpush1.msra.mxu0 %v461
    %1456 = vmatprep.subr.mxu0 0.0
    %1457 = vmatpush1.msra.mxu0 %v468
    %1458 = vmatprep.subr.mxu0 0.0
    %1459 = vmatpush1.msra.mxu0 %v475
    %1460 = vmatprep.subr.mxu0 0.0
    %1461 = vmatpush1.msra.mxu0 %v482
    %1462 = vmatprep.subr.mxu0 0.0
    %1463 = vmatpush1.msra.mxu0 %v489
    %1464 = vmatprep.subr.mxu0 0.0
    %1465 = vmatpush1.msra.mxu0 %v496
    %1466 = vmatprep.subr.mxu0 0.0
    %1467 = vmatpush1.msra.mxu0 %v503
    %1468 = vmatprep.subr.mxu0 0.0
    %1469 = vmatpush1.msra.mxu0 %v510
    %1470 = vmatprep.mubr.f32.mxu0 %v252
    %1471 = vmatmul.mubr.f32.gmra.mrb[0].mxu0 %v251
    %v1472 = vpop.f32.mrb[0].mxu0
    %v1473 = vadd.f32 0.0, %v1472
    %v1474 = vpop.f32.mrb[0].mxu0
    %1475 = vmatprep.mubr.f32.mxu0 %v256
    %1476 = vmatmul.mubr.f32.gmra.mrb[0].mxu0 %v255
    %v1477 = vpop.f32.mrb[0].mxu0
    %v1478 = vadd.f32 0.0, %v1477
    %v1479 = vpop.f32.mrb[0].mxu0
    %1480 = vmatprep.mubr.f32.mxu0 %v260
    %1481 = vmatmul.mubr.f32.gmra.mrb[0].mxu0 %v259
    %v1482 = vpop.f32.mrb[0].mxu0
    %v1483 = vadd.f32 0.0, %v1482
    %v1484 = vpop.f32.mrb[0].mxu0
    %1485 = vmatprep.mubr.f32.mxu0 %v264
    %1486 = vmatmul.mubr.f32.gmra.mrb[0].mxu0 %v263
    %v1487 = vpop.f32.mrb[0].mxu0
    %v1488 = vadd.f32 0.0, %v1487
    %v1489 = vpop.f32.mrb[0].mxu0
    %1490 = vmatprep.mubr.f32.mxu0 %v268
    %1491 = vmatmul.mubr.f32.gmra.mrb[0].mxu0 %v267
    %v1492 = vpop.f32.mrb[0].mxu0
    %v1493 = vadd.f32 0.0, %v1492
    %v1494 = vpop.f32.mrb[0].mxu0
    %1495 = vmatprep.mubr.f32.mxu0 %v272
    %1496 = vmatmul.mubr.f32.gmra.mrb[0].mxu0 %v271
    %v1497 = vpop.f32.mrb[0].mxu0
    %v1498 = vadd.f32 0.0, %v1497
    %v1499 = vpop.f32.mrb[0].mxu0
    %1500 = vmatprep.mubr.f32.mxu0 %v276
    %1501 = vmatmul.mubr.f32.gmra.mrb[0].mxu0 %v275
    %v1502 = vpop.f32.mrb[0].mxu0
    %v1503 = vadd.f32 0.0, %v1502
    %v1504 = vpop.f32.mrb[0].mxu0
    %1505 = vmatprep.mubr.f32.mxu0 %v280
    %1506 = vmatmul.mubr.f32.gmra.mrb[0].mxu0 %v279
    %v1507 = vpop.f32.mrb[0].mxu0
    %v1508 = vadd.f32 0.0, %v1507
    %v1509 = vpop.f32.mrb[0].mxu0
    %1510 = vmatprep.mubr.f32.mxu0 %v284
    %1511 = vmatmul.mubr.f32.gmra.mrb[0].mxu0 %v283
    %v1512 = vpop.f32.mrb[0].mxu0
    %v1513 = vadd.f32 0.0, %v1512
    %v1514 = vpop.f32.mrb[0].mxu0
    %1515 = vdwg.mxu0
    %1516 = vmatprep.subr.mxu0 0.0
    %1517 = vmatpush1.msra.mxu0 %v517
    %1518 = vmatprep.subr.mxu0 0.0
    %1519 = vmatpush1.msra.mxu0 %v524
    %1520 = vmatprep.subr.mxu0 0.0
    %1521 = vmatpush1.msra.mxu0 %v531
    %1522 = vmatprep.subr.mxu0 0.0
    %1523 = vmatpush1.msra.mxu0 %v538
    %1524 = vmatprep.subr.mxu0 0.0
    %1525 = vmatpush1.msra.mxu0 %v545
    %1526 = vmatprep.subr.mxu0 0.0
    %1527 = vmatpush1.msra.mxu0 %v552
    %1528 = vmatprep.subr.mxu0 0.0
    %1529 = vmatpush1.msra.mxu0 %v559
    %1530 = vmatprep.subr.mxu0 0.0
    %1531 = vmatpush1.msra.mxu0 %v566
    %1532 = vmatprep.subr.mxu0 0.0
    %1533 = vmatpush1.msra.mxu0 %v573
    %1534 = vmatprep.subr.mxu0 0.0
    %1535 = vmatpush1.msra.mxu0 %v580
    %1536 = vmatprep.subr.mxu0 0.0
    %1537 = vmatpush1.msra.mxu0 %v587
    %1538 = vmatprep.subr.mxu0 0.0
    %1539 = vmatpush1.msra.mxu0 %v594
    %1540 = vmatprep.subr.mxu0 0.0
    %1541 = vmatpush1.msra.mxu0 %v601
    %1542 = vmatprep.subr.mxu0 0.0
    %1543 = vmatpush1.msra.mxu0 %v608
    %1544 = vmatprep.subr.mxu0 0.0
    %1545 = vmatpush1.msra.mxu0 %v615
    %1546 = vmatprep.subr.mxu0 0.0
    %1547 = vmatpush1.msra.mxu0 %v622
    %1548 = vmatprep.subr.mxu0 0.0
    %1549 = vmatpush1.msra.mxu0 %v629
    %1550 = vmatprep.subr.mxu0 0.0
    %1551 = vmatpush1.msra.mxu0 %v636
    %1552 = vmatprep.subr.mxu0 0.0
    %1553 = vmatpush1.msra.mxu0 %v643
    %1554 = vmatprep.subr.mxu0 0.0
    %1555 = vmatpush1.msra.mxu0 %v650
    %1556 = vmatprep.subr.mxu0 0.0
    %1557 = vmatpush1.msra.mxu0 %v657
    %1558 = vmatprep.subr.mxu0 0.0
    %1559 = vmatpush1.msra.mxu0 %v664
    %1560 = vmatprep.subr.mxu0 0.0
    %1561 = vmatpush1.msra.mxu0 0.0
    %1562 = vmatprep.subr.mxu0 0.0
    %1563 = vmatpush1.msra.mxu0 0.0
    %1564 = vmatprep.subr.mxu0 0.0
    %1565 = vmatpush1.msra.mxu0 0.0
    %1566 = vmatprep.subr.mxu0 0.0
    %1567 = vmatpush1.msra.mxu0 0.0
    %1568 = vmatprep.subr.mxu0 0.0
    %1569 = vmatpush1.msra.mxu0 0.0
    %1570 = vmatprep.subr.mxu0 0.0
    %1571 = vmatpush1.msra.mxu0 0.0
    %1572 = vmatprep.subr.mxu0 0.0
    %1573 = vmatpush1.msra.mxu0 0.0
    %1574 = vmatprep.subr.mxu0 0.0
    %1575 = vmatpush1.msra.mxu0 0.0
    %1576 = vmatprep.subr.mxu0 0.0
    %1577 = vmatpush1.msra.mxu0 0.0
    %1578 = vmatprep.subr.mxu0 0.0
    %1579 = vmatpush1.msra.mxu0 0.0
    %1580 = vmatprep.mubr.f32.mxu0 %v666
    %1581 = vmatmul.mubr.f32.gmra.mrb[0].mxu0 %v253
    %v1582 = vpop.f32.mrb[0].mxu0
    %v1583 = vadd.f32 %v1473, %v1582
    %v1584 = vpop.f32.mrb[0].mxu0
    %1585 = vmatprep.mubr.f32.mxu0 %v669
    %1586 = vmatmul.mubr.f32.gmra.mrb[0].mxu0 %v257
    %v1587 = vpop.f32.mrb[0].mxu0
    %v1588 = vadd.f32 %v1478, %v1587
    %v1589 = vpop.f32.mrb[0].mxu0
    %1590 = vmatprep.mubr.f32.mxu0 %v672
    %1591 = vmatmul.mubr.f32.gmra.mrb[0].mxu0 %v261
    %v1592 = vpop.f32.mrb[0].mxu0
    %v1593 = vadd.f32 %v1483, %v1592
    %v1594 = vpop.f32.mrb[0].mxu0
    %1595 = vmatprep.mubr.f32.mxu0 %v675
    %1596 = vmatmul.mubr.f32.gmra.mrb[0].mxu0 %v265
    %v1597 = vpop.f32.mrb[0].mxu0
    %v1598 = vadd.f32 %v1488, %v1597
    %v1599 = vpop.f32.mrb[0].mxu0
    %1600 = vmatprep.mubr.f32.mxu0 %v678
    %1601 = vmatmul.mubr.f32.gmra.mrb[0].mxu0 %v269
    %v1602 = vpop.f32.mrb[0].mxu0
    %v1603 = vadd.f32 %v1493, %v1602
    %v1604 = vpop.f32.mrb[0].mxu0
    %1605 = vmatprep.mubr.f32.mxu0 %v681
    %1606 = vmatmul.mubr.f32.gmra.mrb[0].mxu0 %v273
    %v1607 = vpop.f32.mrb[0].mxu0
    %v1608 = vadd.f32 %v1498, %v1607
    %v1609 = vpop.f32.mrb[0].mxu0
    %1610 = vmatprep.mubr.f32.mxu0 %v684
    %1611 = vmatmul.mubr.f32.gmra.mrb[0].mxu0 %v277
    %v1612 = vpop.f32.mrb[0].mxu0
    %v1613 = vadd.f32 %v1503, %v1612
    %v1614 = vpop.f32.mrb[0].mxu0
    %1615 = vmatprep.mubr.f32.mxu0 %v687
    %1616 = vmatmul.mubr.f32.gmra.mrb[0].mxu0 %v281
    %v1617 = vpop.f32.mrb[0].mxu0
    %v1618 = vadd.f32 %v1508, %v1617
    %v1619 = vpop.f32.mrb[0].mxu0
    %1620 = vmatprep.mubr.f32.mxu0 %v690
    %1621 = vmatmul.mubr.f32.gmra.mrb[0].mxu0 %v285
    %v1622 = vpop.f32.mrb[0].mxu0
    %v1623 = vadd.f32 %v1513, %v1622
    %v1624 = vpop.f32.mrb[0].mxu0
    %1625 = vdwg.mxu0
    %v1626 = vadd.f32 %v878, %v880
    %v1627 = vadd.f32 %v1626, %v1116
    %v1628 = vadd.f32 %v1627, %v1118
    %v1629 = vadd.f32 %v1628, %v1354
    %v1630 = vadd.f32 %v1629, %v1356
    %vm1631 = vcmask 130048
    %v1632 = vsel %vm1631, %v1583, 0.0
    %v1633 = vadd.f32 %v1630, %v1632
    %1634 = vadd.xlane.f32.xlu0 %v1633
    %v1635 = vpop.xlane.xlu0 %1634
    %v1636 = vadd.f32 %v884, %v886
    %v1637 = vadd.f32 %v1636, %v1122
    %v1638 = vadd.f32 %v1637, %v1124
    %v1639 = vadd.f32 %v1638, %v1360
    %v1640 = vadd.f32 %v1639, %v1362
    %v1641 = vsel %vm1631, %v1588, 0.0
    %v1642 = vadd.f32 %v1640, %v1641
    %1643 = vadd.xlane.f32.xlu0 %v1642
    %v1644 = vpop.xlane.xlu0 %1643
    %v1645 = vadd.f32 %v890, %v892
    %v1646 = vadd.f32 %v1645, %v1128
    %v1647 = vadd.f32 %v1646, %v1130
    %v1648 = vadd.f32 %v1647, %v1366
    %v1649 = vadd.f32 %v1648, %v1368
    %v1650 = vsel %vm1631, %v1593, 0.0
    %v1651 = vadd.f32 %v1649, %v1650
    %1652 = vadd.xlane.f32.xlu0 %v1651
    %v1653 = vpop.xlane.xlu0 %1652
    %v1654 = vadd.f32 %v896, %v898
    %v1655 = vadd.f32 %v1654, %v1134
    %v1656 = vadd.f32 %v1655, %v1136
    %v1657 = vadd.f32 %v1656, %v1372
    %v1658 = vadd.f32 %v1657, %v1374
    %v1659 = vsel %vm1631, %v1598, 0.0
    %v1660 = vadd.f32 %v1658, %v1659
    %1661 = vadd.xlane.f32.xlu0 %v1660
    %v1662 = vpop.xlane.xlu0 %1661
    %v1663 = vadd.f32 %v902, %v904
    %v1664 = vadd.f32 %v1663, %v1140
    %v1665 = vadd.f32 %v1664, %v1142
    %v1666 = vadd.f32 %v1665, %v1378
    %v1667 = vadd.f32 %v1666, %v1380
    %v1668 = vsel %vm1631, %v1603, 0.0
    %v1669 = vadd.f32 %v1667, %v1668
    %1670 = vadd.xlane.f32.xlu0 %v1669
    %v1671 = vpop.xlane.xlu0 %1670
    %v1672 = vadd.f32 %v908, %v910
    %v1673 = vadd.f32 %v1672, %v1146
    %v1674 = vadd.f32 %v1673, %v1148
    %v1675 = vadd.f32 %v1674, %v1384
    %v1676 = vadd.f32 %v1675, %v1386
    %v1677 = vsel %vm1631, %v1608, 0.0
    %v1678 = vadd.f32 %v1676, %v1677
    %1679 = vadd.xlane.f32.xlu0 %v1678
    %v1680 = vpop.xlane.xlu0 %1679
    %v1681 = vadd.f32 %v914, %v916
    %v1682 = vadd.f32 %v1681, %v1152
    %v1683 = vadd.f32 %v1682, %v1154
    %v1684 = vadd.f32 %v1683, %v1390
    %v1685 = vadd.f32 %v1684, %v1392
    %v1686 = vsel %vm1631, %v1613, 0.0
    %v1687 = vadd.f32 %v1685, %v1686
    %1688 = vadd.xlane.f32.xlu0 %v1687
    %v1689 = vpop.xlane.xlu0 %1688
    %v1690 = vadd.f32 %v920, %v922
    %v1691 = vadd.f32 %v1690, %v1158
    %v1692 = vadd.f32 %v1691, %v1160
    %v1693 = vadd.f32 %v1692, %v1396
    %v1694 = vadd.f32 %v1693, %v1398
    %v1695 = vsel %vm1631, %v1618, 0.0
    %v1696 = vadd.f32 %v1694, %v1695
    %1697 = vadd.xlane.f32.xlu0 %v1696
    %v1698 = vpop.xlane.xlu0 %1697
    %v1699 = vadd.f32 %v926, %v928
    %v1700 = vadd.f32 %v1699, %v1164
    %v1701 = vadd.f32 %v1700, %v1166
    %v1702 = vadd.f32 %v1701, %v1402
    %v1703 = vadd.f32 %v1702, %v1404
    %v1704 = vsel %vm1631, %v1623, 0.0
    %v1705 = vadd.f32 %v1703, %v1704
    %1706 = vadd.xlane.f32.xlu0 %v1705
    %v1707 = vpop.xlane.xlu0 %1706
    %p1708 = scmp.eq.s32.totalorder 0, 0
    // Predicated region
    $region42: #{tpu_custom_call.1} parent=1 // pred_check
      %p1709 = pneg %p1708
    $region43: #{tpu_custom_call.1} parent=1 // pred_check_branch
      %1711 = sbr.rel (%p1709) target = $region45
    $region44: #{tpu_custom_call.1} parent=1 // pred_region
      %1712 = vst [vmem:[#allocation9] sm:$0xff] %v878
      %1713 = vst [vmem:[#allocation9 + $0x8] sm:$0xff] %v880
      %1714 = vst [vmem:[#allocation9 + $0x10] sm:$0xff] %v1116
      %1715 = vst [vmem:[#allocation9 + $0x18] sm:$0xff] %v1118
      %1716 = vst [vmem:[#allocation9 + $0x20] sm:$0xff] %v1354
      %1717 = vst [vmem:[#allocation9 + $0x28] sm:$0xff] %v1356
      %1718 = vst.msk [vmem:[#allocation9 + $0x30] sm:$0xff] %vm1631, %v1583
      %1719 = vst [vmem:[#allocation9 + $0x38] sm:$0xff] %v884
      %1720 = vst [vmem:[#allocation9 + $0x40] sm:$0xff] %v886
      %1721 = vst [vmem:[#allocation9 + $0x48] sm:$0xff] %v1122
      %1722 = vst [vmem:[#allocation9 + $0x50] sm:$0xff] %v1124
      %1723 = vst [vmem:[#allocation9 + $0x58] sm:$0xff] %v1360
      %1724 = vst [vmem:[#allocation9 + $0x60] sm:$0xff] %v1362
      %1725 = vst.msk [vmem:[#allocation9 + $0x68] sm:$0xff] %vm1631, %v1588
      %1726 = vst [vmem:[#allocation9 + $0x70] sm:$0xff] %v890
      %1727 = vst [vmem:[#allocation9 + $0x78] sm:$0xff] %v892
      %1728 = vst [vmem:[#allocation9 + $0x80] sm:$0xff] %v1128
      %1729 = vst [vmem:[#allocation9 + $0x88] sm:$0xff] %v1130
      %1730 = vst [vmem:[#allocation9 + $0x90] sm:$0xff] %v1366
      %1731 = vst [vmem:[#allocation9 + $0x98] sm:$0xff] %v1368
      %1732 = vst.msk [vmem:[#allocation9 + $0xa0] sm:$0xff] %vm1631, %v1593
      %1733 = vst [vmem:[#allocation9 + $0xa8] sm:$0xff] %v896
      %1734 = vst [vmem:[#allocation9 + $0xb0] sm:$0xff] %v898
      %1735 = vst [vmem:[#allocation9 + $0xb8] sm:$0xff] %v1134
      %1736 = vst [vmem:[#allocation9 + $0xc0] sm:$0xff] %v1136
      %1737 = vst [vmem:[#allocation9 + $0xc8] sm:$0xff] %v1372
      %1738 = vst [vmem:[#allocation9 + $0xd0] sm:$0xff] %v1374
      %1739 = vst.msk [vmem:[#allocation9 + $0xd8] sm:$0xff] %vm1631, %v1598
      %1740 = vst [vmem:[#allocation9 + $0xe0] sm:$0xff] %v902
      %1741 = vst [vmem:[#allocation9 + $0xe8] sm:$0xff] %v904
      %1742 = vst [vmem:[#allocation9 + $0xf0] sm:$0xff] %v1140
      %1743 = vst [vmem:[#allocation9 + $0xf8] sm:$0xff] %v1142
      %1744 = vst [vmem:[#allocation9 + $0x100] sm:$0xff] %v1378
      %1745 = vst [vmem:[#allocation9 + $0x108] sm:$0xff] %v1380
      %1746 = vst.msk [vmem:[#allocation9 + $0x110] sm:$0xff] %vm1631, %v1603
      %1747 = vst [vmem:[#allocation9 + $0x118] sm:$0xff] %v908
      %1748 = vst [vmem:[#allocation9 + $0x120] sm:$0xff] %v910
      %1749 = vst [vmem:[#allocation9 + $0x128] sm:$0xff] %v1146
      %1750 = vst [vmem:[#allocation9 + $0x130] sm:$0xff] %v1148
      %1751 = vst [vmem:[#allocation9 + $0x138] sm:$0xff] %v1384
      %1752 = vst [vmem:[#allocation9 + $0x140] sm:$0xff] %v1386
      %1753 = vst.msk [vmem:[#allocation9 + $0x148] sm:$0xff] %vm1631, %v1608
      %1754 = vst [vmem:[#allocation9 + $0x150] sm:$0xff] %v914
      %1755 = vst [vmem:[#allocation9 + $0x158] sm:$0xff] %v916
      %1756 = vst [vmem:[#allocation9 + $0x160] sm:$0xff] %v1152
      %1757 = vst [vmem:[#allocation9 + $0x168] sm:$0xff] %v1154
      %1758 = vst [vmem:[#allocation9 + $0x170] sm:$0xff] %v1390
      %1759 = vst [vmem:[#allocation9 + $0x178] sm:$0xff] %v1392
      %1760 = vst.msk [vmem:[#allocation9 + $0x180] sm:$0xff] %vm1631, %v1613
      %1761 = vst [vmem:[#allocation9 + $0x188] sm:$0xff] %v920
      %1762 = vst [vmem:[#allocation9 + $0x190] sm:$0xff] %v922
      %1763 = vst [vmem:[#allocation9 + $0x198] sm:$0xff] %v1158
      %1764 = vst [vmem:[#allocation9 + $0x1a0] sm:$0xff] %v1160
      %1765 = vst [vmem:[#allocation9 + $0x1a8] sm:$0xff] %v1396
      %1766 = vst [vmem:[#allocation9 + $0x1b0] sm:$0xff] %v1398
      %1767 = vst.msk [vmem:[#allocation9 + $0x1b8] sm:$0xff] %vm1631, %v1618
      %1768 = vst [vmem:[#allocation9 + $0x1c0] sm:$0xff] %v926
      %1769 = vst [vmem:[#allocation9 + $0x1c8] sm:$0xff] %v928
      %1770 = vst [vmem:[#allocation9 + $0x1d0] sm:$0xff] %v1164
      %1771 = vst [vmem:[#allocation9 + $0x1d8] sm:$0xff] %v1166
      %1772 = vst [vmem:[#allocation9 + $0x1e0] sm:$0xff] %v1402
      %1773 = vst [vmem:[#allocation9 + $0x1e8] sm:$0xff] %v1404
      %1774 = vst.msk [vmem:[#allocation9 + $0x1f0] sm:$0xff] %vm1631, %v1623
      %vm1775 = vcmask 7168
      %1776 = vst.msk [vmem:[#allocation2] sm:$0xff] %vm1775, %v1635
      %1777 = vst.msk [vmem:[#allocation2 + $0x8] sm:$0xff] %vm1775, %v1644
      %1778 = vst.msk [vmem:[#allocation2 + $0x10] sm:$0xff] %vm1775, %v1653
      %1779 = vst.msk [vmem:[#allocation2 + $0x18] sm:$0xff] %vm1775, %v1662
      %1780 = vst.msk [vmem:[#allocation2 + $0x20] sm:$0xff] %vm1775, %v1671
      %1781 = vst.msk [vmem:[#allocation2 + $0x28] sm:$0xff] %vm1775, %v1680
      %1782 = vst.msk [vmem:[#allocation2 + $0x30] sm:$0xff] %vm1775, %v1689
      %1783 = vst.msk [vmem:[#allocation2 + $0x38] sm:$0xff] %vm1775, %v1698
      %1784 = vst.msk [vmem:[#allocation2 + $0x40] sm:$0xff] %vm1775, %v1707
    $region45: #{tpu_custom_call.1} parent=1 // pred_fallthru
      _
    %p1785 = scmp.ne.s32.totalorder 0, 0
    // Predicated region
    $region46: #{tpu_custom_call.1} parent=1 // pred_check
      %p1786 = pneg %p1785
    $region47: #{tpu_custom_call.1} parent=1 // pred_check_branch
      %1788 = sbr.rel (%p1786) target = $region49
    $region48: #{tpu_custom_call.1} parent=1 // pred_region
      %v1789 = vld [vmem:[#allocation9] sm:$0xff]
      %v1790 = vld [vmem:[#allocation9 + $0x8] sm:$0xff]
      %v1791 = vld [vmem:[#allocation9 + $0x10] sm:$0xff]
      %v1792 = vld [vmem:[#allocation9 + $0x18] sm:$0xff]
      %v1793 = vld [vmem:[#allocation9 + $0x20] sm:$0xff]
      %v1794 = vld [vmem:[#allocation9 + $0x28] sm:$0xff]
      %v1795 = vld [vmem:[#allocation9 + $0x30] sm:$0xff]
      %v1796 = vld [vmem:[#allocation9 + $0x38] sm:$0xff]
      %v1797 = vld [vmem:[#allocation9 + $0x40] sm:$0xff]
      %v1798 = vld [vmem:[#allocation9 + $0x48] sm:$0xff]
      %v1799 = vld [vmem:[#allocation9 + $0x50] sm:$0xff]
      %v1800 = vld [vmem:[#allocation9 + $0x58] sm:$0xff]
      %v1801 = vld [vmem:[#allocation9 + $0x60] sm:$0xff]
      %v1802 = vld [vmem:[#allocation9 + $0x68] sm:$0xff]
      %v1803 = vld [vmem:[#allocation9 + $0x70] sm:$0xff]
      %v1804 = vld [vmem:[#allocation9 + $0x78] sm:$0xff]
      %v1805 = vld [vmem:[#allocation9 + $0x80] sm:$0xff]
      %v1806 = vld [vmem:[#allocation9 + $0x88] sm:$0xff]
      %v1807 = vld [vmem:[#allocation9 + $0x90] sm:$0xff]
      %v1808 = vld [vmem:[#allocation9 + $0x98] sm:$0xff]
      %v1809 = vld [vmem:[#allocation9 + $0xa0] sm:$0xff]
      %v1810 = vld [vmem:[#allocation9 + $0xa8] sm:$0xff]
      %v1811 = vld [vmem:[#allocation9 + $0xb0] sm:$0xff]
      %v1812 = vld [vmem:[#allocation9 + $0xb8] sm:$0xff]
      %v1813 = vld [vmem:[#allocation9 + $0xc0] sm:$0xff]
      %v1814 = vld [vmem:[#allocation9 + $0xc8] sm:$0xff]
      %v1815 = vld [vmem:[#allocation9 + $0xd0] sm:$0xff]
      %v1816 = vld [vmem:[#allocation9 + $0xd8] sm:$0xff]
      %v1817 = vld [vmem:[#allocation9 + $0xe0] sm:$0xff]
      %v1818 = vld [vmem:[#allocation9 + $0xe8] sm:$0xff]
      %v1819 = vld [vmem:[#allocation9 + $0xf0] sm:$0xff]
      %v1820 = vld [vmem:[#allocation9 + $0xf8] sm:$0xff]
      %v1821 = vld [vmem:[#allocation9 + $0x100] sm:$0xff]
      %v1822 = vld [vmem:[#allocation9 + $0x108] sm:$0xff]
      %v1823 = vld [vmem:[#allocation9 + $0x110] sm:$0xff]
      %v1824 = vld [vmem:[#allocation9 + $0x118] sm:$0xff]
      %v1825 = vld [vmem:[#allocation9 + $0x120] sm:$0xff]
      %v1826 = vld [vmem:[#allocation9 + $0x128] sm:$0xff]
      %v1827 = vld [vmem:[#allocation9 + $0x130] sm:$0xff]
      %v1828 = vld [vmem:[#allocation9 + $0x138] sm:$0xff]
      %v1829 = vld [vmem:[#allocation9 + $0x140] sm:$0xff]
      %v1830 = vld [vmem:[#allocation9 + $0x148] sm:$0xff]
      %v1831 = vld [vmem:[#allocation9 + $0x150] sm:$0xff]
      %v1832 = vld [vmem:[#allocation9 + $0x158] sm:$0xff]
      %v1833 = vld [vmem:[#allocation9 + $0x160] sm:$0xff]
      %v1834 = vld [vmem:[#allocation9 + $0x168] sm:$0xff]
      %v1835 = vld [vmem:[#allocation9 + $0x170] sm:$0xff]
      %v1836 = vld [vmem:[#allocation9 + $0x178] sm:$0xff]
      %v1837 = vld [vmem:[#allocation9 + $0x180] sm:$0xff]
      %v1838 = vld [vmem:[#allocation9 + $0x188] sm:$0xff]
      %v1839 = vld [vmem:[#allocation9 + $0x190] sm:$0xff]
      %v1840 = vld [vmem:[#allocation9 + $0x198] sm:$0xff]
      %v1841 = vld [vmem:[#allocation9 + $0x1a0] sm:$0xff]
      %v1842 = vld [vmem:[#allocation9 + $0x1a8] sm:$0xff]
      %v1843 = vld [vmem:[#allocation9 + $0x1b0] sm:$0xff]
      %v1844 = vld [vmem:[#allocation9 + $0x1b8] sm:$0xff]
      %v1845 = vld [vmem:[#allocation9 + $0x1c0] sm:$0xff]
      %v1846 = vld [vmem:[#allocation9 + $0x1c8] sm:$0xff]
      %v1847 = vld [vmem:[#allocation9 + $0x1d0] sm:$0xff]
      %v1848 = vld [vmem:[#allocation9 + $0x1d8] sm:$0xff]
      %v1849 = vld [vmem:[#allocation9 + $0x1e0] sm:$0xff]
      %v1850 = vld [vmem:[#allocation9 + $0x1e8] sm:$0xff]
      %v1851 = vld [vmem:[#allocation9 + $0x1f0] sm:$0xff]
      %v1852 = vadd.f32 %v1789, %v878
      %v1853 = vadd.f32 %v1790, %v880
      %v1854 = vadd.f32 %v1791, %v1116
      %v1855 = vadd.f32 %v1792, %v1118
      %v1856 = vadd.f32 %v1793, %v1354
      %v1857 = vadd.f32 %v1794, %v1356
      %v1858 = vadd.f32 %v1795, %v1583
      %v1859 = vadd.f32 %v1796, %v884
      %v1860 = vadd.f32 %v1797, %v886
      %v1861 = vadd.f32 %v1798, %v1122
      %v1862 = vadd.f32 %v1799, %v1124
      %v1863 = vadd.f32 %v1800, %v1360
      %v1864 = vadd.f32 %v1801, %v1362
      %v1865 = vadd.f32 %v1802, %v1588
      %v1866 = vadd.f32 %v1803, %v890
      %v1867 = vadd.f32 %v1804, %v892
      %v1868 = vadd.f32 %v1805, %v1128
      %v1869 = vadd.f32 %v1806, %v1130
      %v1870 = vadd.f32 %v1807, %v1366
      %v1871 = vadd.f32 %v1808, %v1368
      %v1872 = vadd.f32 %v1809, %v1593
      %v1873 = vadd.f32 %v1810, %v896
      %v1874 = vadd.f32 %v1811, %v898
      %v1875 = vadd.f32 %v1812, %v1134
      %v1876 = vadd.f32 %v1813, %v1136
      %v1877 = vadd.f32 %v1814, %v1372
      %v1878 = vadd.f32 %v1815, %v1374
      %v1879 = vadd.f32 %v1816, %v1598
      %v1880 = vadd.f32 %v1817, %v902
      %v1881 = vadd.f32 %v1818, %v904
      %v1882 = vadd.f32 %v1819, %v1140
      %v1883 = vadd.f32 %v1820, %v1142
      %v1884 = vadd.f32 %v1821, %v1378
      %v1885 = vadd.f32 %v1822, %v1380
      %v1886 = vadd.f32 %v1823, %v1603
      %v1887 = vadd.f32 %v1824, %v908
      %v1888 = vadd.f32 %v1825, %v910
      %v1889 = vadd.f32 %v1826, %v1146
      %v1890 = vadd.f32 %v1827, %v1148
      %v1891 = vadd.f32 %v1828, %v1384
      %v1892 = vadd.f32 %v1829, %v1386
      %v1893 = vadd.f32 %v1830, %v1608
      %v1894 = vadd.f32 %v1831, %v914
      %v1895 = vadd.f32 %v1832, %v916
      %v1896 = vadd.f32 %v1833, %v1152
      %v1897 = vadd.f32 %v1834, %v1154
      %v1898 = vadd.f32 %v1835, %v1390
      %v1899 = vadd.f32 %v1836, %v1392
      %v1900 = vadd.f32 %v1837, %v1613
      %v1901 = vadd.f32 %v1838, %v920
      %v1902 = vadd.f32 %v1839, %v922
      %v1903 = vadd.f32 %v1840, %v1158
      %v1904 = vadd.f32 %v1841, %v1160
      %v1905 = vadd.f32 %v1842, %v1396
      %v1906 = vadd.f32 %v1843, %v1398
      %v1907 = vadd.f32 %v1844, %v1618
      %v1908 = vadd.f32 %v1845, %v926
      %v1909 = vadd.f32 %v1846, %v928
      %v1910 = vadd.f32 %v1847, %v1164
      %v1911 = vadd.f32 %v1848, %v1166
      %v1912 = vadd.f32 %v1849, %v1402
      %v1913 = vadd.f32 %v1850, %v1404
      %v1914 = vadd.f32 %v1851, %v1623
      %1915 = vst [vmem:[#allocation9] sm:$0xff] %v1852
      %1916 = vst [vmem:[#allocation9 + $0x8] sm:$0xff] %v1853
      %1917 = vst [vmem:[#allocation9 + $0x10] sm:$0xff] %v1854
      %1918 = vst [vmem:[#allocation9 + $0x18] sm:$0xff] %v1855
      %1919 = vst [vmem:[#allocation9 + $0x20] sm:$0xff] %v1856
      %1920 = vst [vmem:[#allocation9 + $0x28] sm:$0xff] %v1857
      %1921 = vst.msk [vmem:[#allocation9 + $0x30] sm:$0xff] %vm1631, %v1858
      %1922 = vst [vmem:[#allocation9 + $0x38] sm:$0xff] %v1859
      %1923 = vst [vmem:[#allocation9 + $0x40] sm:$0xff] %v1860
      %1924 = vst [vmem:[#allocation9 + $0x48] sm:$0xff] %v1861
      %1925 = vst [vmem:[#allocation9 + $0x50] sm:$0xff] %v1862
      %1926 = vst [vmem:[#allocation9 + $0x58] sm:$0xff] %v1863
      %1927 = vst [vmem:[#allocation9 + $0x60] sm:$0xff] %v1864
      %1928 = vst.msk [vmem:[#allocation9 + $0x68] sm:$0xff] %vm1631, %v1865
      %1929 = vst [vmem:[#allocation9 + $0x70] sm:$0xff] %v1866
      %1930 = vst [vmem:[#allocation9 + $0x78] sm:$0xff] %v1867
      %1931 = vst [vmem:[#allocation9 + $0x80] sm:$0xff] %v1868
      %1932 = vst [vmem:[#allocation9 + $0x88] sm:$0xff] %v1869
      %1933 = vst [vmem:[#allocation9 + $0x90] sm:$0xff] %v1870
      %1934 = vst [vmem:[#allocation9 + $0x98] sm:$0xff] %v1871
      %1935 = vst.msk [vmem:[#allocation9 + $0xa0] sm:$0xff] %vm1631, %v1872
      %1936 = vst [vmem:[#allocation9 + $0xa8] sm:$0xff] %v1873
      %1937 = vst [vmem:[#allocation9 + $0xb0] sm:$0xff] %v1874
      %1938 = vst [vmem:[#allocation9 + $0xb8] sm:$0xff] %v1875
      %1939 = vst [vmem:[#allocation9 + $0xc0] sm:$0xff] %v1876
      %1940 = vst [vmem:[#allocation9 + $0xc8] sm:$0xff] %v1877
      %1941 = vst [vmem:[#allocation9 + $0xd0] sm:$0xff] %v1878
      %1942 = vst.msk [vmem:[#allocation9 + $0xd8] sm:$0xff] %vm1631, %v1879
      %1943 = vst [vmem:[#allocation9 + $0xe0] sm:$0xff] %v1880
      %1944 = vst [vmem:[#allocation9 + $0xe8] sm:$0xff] %v1881
      %1945 = vst [vmem:[#allocation9 + $0xf0] sm:$0xff] %v1882
      %1946 = vst [vmem:[#allocation9 + $0xf8] sm:$0xff] %v1883
      %1947 = vst [vmem:[#allocation9 + $0x100] sm:$0xff] %v1884
      %1948 = vst [vmem:[#allocation9 + $0x108] sm:$0xff] %v1885
      %1949 = vst.msk [vmem:[#allocation9 + $0x110] sm:$0xff] %vm1631, %v1886
      %1950 = vst [vmem:[#allocation9 + $0x118] sm:$0xff] %v1887
      %1951 = vst [vmem:[#allocation9 + $0x120] sm:$0xff] %v1888
      %1952 = vst [vmem:[#allocation9 + $0x128] sm:$0xff] %v1889
      %1953 = vst [vmem:[#allocation9 + $0x130] sm:$0xff] %v1890
      %1954 = vst [vmem:[#allocation9 + $0x138] sm:$0xff] %v1891
      %1955 = vst [vmem:[#allocation9 + $0x140] sm:$0xff] %v1892
      %1956 = vst.msk [vmem:[#allocation9 + $0x148] sm:$0xff] %vm1631, %v1893
      %1957 = vst [vmem:[#allocation9 + $0x150] sm:$0xff] %v1894
      %1958 = vst [vmem:[#allocation9 + $0x158] sm:$0xff] %v1895
      %1959 = vst [vmem:[#allocation9 + $0x160] sm:$0xff] %v1896
      %1960 = vst [vmem:[#allocation9 + $0x168] sm:$0xff] %v1897
      %1961 = vst [vmem:[#allocation9 + $0x170] sm:$0xff] %v1898
      %1962 = vst [vmem:[#allocation9 + $0x178] sm:$0xff] %v1899
      %1963 = vst.msk [vmem:[#allocation9 + $0x180] sm:$0xff] %vm1631, %v1900
      %1964 = vst [vmem:[#allocation9 + $0x188] sm:$0xff] %v1901
      %1965 = vst [vmem:[#allocation9 + $0x190] sm:$0xff] %v1902
      %1966 = vst [vmem:[#allocation9 + $0x198] sm:$0xff] %v1903
      %1967 = vst [vmem:[#allocation9 + $0x1a0] sm:$0xff] %v1904
      %1968 = vst [vmem:[#allocation9 + $0x1a8] sm:$0xff] %v1905
      %1969 = vst [vmem:[#allocation9 + $0x1b0] sm:$0xff] %v1906
      %1970 = vst.msk [vmem:[#allocation9 + $0x1b8] sm:$0xff] %vm1631, %v1907
      %1971 = vst [vmem:[#allocation9 + $0x1c0] sm:$0xff] %v1908
      %1972 = vst [vmem:[#allocation9 + $0x1c8] sm:$0xff] %v1909
      %1973 = vst [vmem:[#allocation9 + $0x1d0] sm:$0xff] %v1910
      %1974 = vst [vmem:[#allocation9 + $0x1d8] sm:$0xff] %v1911
      %1975 = vst [vmem:[#allocation9 + $0x1e0] sm:$0xff] %v1912
      %1976 = vst [vmem:[#allocation9 + $0x1e8] sm:$0xff] %v1913
      %1977 = vst.msk [vmem:[#allocation9 + $0x1f0] sm:$0xff] %vm1631, %v1914
      %v1978 = vld [vmem:[#allocation2] sm:$0xff]
      %v1979 = vld [vmem:[#allocation2 + $0x8] sm:$0xff]
      %v1980 = vld [vmem:[#allocation2 + $0x10] sm:$0xff]
      %v1981 = vld [vmem:[#allocation2 + $0x18] sm:$0xff]
      %v1982 = vld [vmem:[#allocation2 + $0x20] sm:$0xff]
      %v1983 = vld [vmem:[#allocation2 + $0x28] sm:$0xff]
      %v1984 = vld [vmem:[#allocation2 + $0x30] sm:$0xff]
      %v1985 = vld [vmem:[#allocation2 + $0x38] sm:$0xff]
      %v1986 = vld [vmem:[#allocation2 + $0x40] sm:$0xff]
      %v1987 = vadd.f32 %v1978, %v1635
      %v1988 = vadd.f32 %v1979, %v1644
      %v1989 = vadd.f32 %v1980, %v1653
      %v1990 = vadd.f32 %v1981, %v1662
      %v1991 = vadd.f32 %v1982, %v1671
      %v1992 = vadd.f32 %v1983, %v1680
      %v1993 = vadd.f32 %v1984, %v1689
      %v1994 = vadd.f32 %v1985, %v1698
      %v1995 = vadd.f32 %v1986, %v1707
      %vm1996 = vcmask 7168
      %1997 = vst.msk [vmem:[#allocation2] sm:$0xff] %vm1996, %v1987
      %1998 = vst.msk [vmem:[#allocation2 + $0x8] sm:$0xff] %vm1996, %v1988
      %1999 = vst.msk [vmem:[#allocation2 + $0x10] sm:$0xff] %vm1996, %v1989
      %2000 = vst.msk [vmem:[#allocation2 + $0x18] sm:$0xff] %vm1996, %v1990
      %2001 = vst.msk [vmem:[#allocation2 + $0x20] sm:$0xff] %vm1996, %v1991
      %2002 = vst.msk [vmem:[#allocation2 + $0x28] sm:$0xff] %vm1996, %v1992
      %2003 = vst.msk [vmem:[#allocation2 + $0x30] sm:$0xff] %vm1996, %v1993
      %2004 = vst.msk [vmem:[#allocation2 + $0x38] sm:$0xff] %vm1996, %v1994
      %2005 = vst.msk [vmem:[#allocation2 + $0x40] sm:$0xff] %vm1996, %v1995
    $region49: #{tpu_custom_call.1} parent=1 // pred_fallthru
      _
    // Predicated region
    $region50: #{tpu_custom_call.1} parent=1 // pred_check
      %p2006 = pneg %p1708
    $region51: #{tpu_custom_call.1} parent=1 // pred_check_branch
      %2008 = sbr.rel (%p2006) target = $region53
    $region52: #{tpu_custom_call.1} parent=1 // pred_region
      %v2009 = vld [vmem:[#allocation9] sm:$0xff]
      %v2010 = vld [vmem:[#allocation9 + $0x8] sm:$0xff]
      %v2011 = vld [vmem:[#allocation9 + $0x10] sm:$0xff]
      %v2012 = vld [vmem:[#allocation9 + $0x18] sm:$0xff]
      %v2013 = vld [vmem:[#allocation9 + $0x20] sm:$0xff]
      %v2014 = vld [vmem:[#allocation9 + $0x28] sm:$0xff]
      %v2015 = vld [vmem:[#allocation9 + $0x30] sm:$0xff]
      %v2016 = vld [vmem:[#allocation9 + $0x38] sm:$0xff]
      %v2017 = vld [vmem:[#allocation9 + $0x40] sm:$0xff]
      %v2018 = vld [vmem:[#allocation9 + $0x48] sm:$0xff]
      %v2019 = vld [vmem:[#allocation9 + $0x50] sm:$0xff]
      %v2020 = vld [vmem:[#allocation9 + $0x58] sm:$0xff]
      %v2021 = vld [vmem:[#allocation9 + $0x60] sm:$0xff]
      %v2022 = vld [vmem:[#allocation9 + $0x68] sm:$0xff]
      %v2023 = vld [vmem:[#allocation9 + $0x70] sm:$0xff]
      %v2024 = vld [vmem:[#allocation9 + $0x78] sm:$0xff]
      %v2025 = vld [vmem:[#allocation9 + $0x80] sm:$0xff]
      %v2026 = vld [vmem:[#allocation9 + $0x88] sm:$0xff]
      %v2027 = vld [vmem:[#allocation9 + $0x90] sm:$0xff]
      %v2028 = vld [vmem:[#allocation9 + $0x98] sm:$0xff]
      %v2029 = vld [vmem:[#allocation9 + $0xa0] sm:$0xff]
      %v2030 = vld [vmem:[#allocation9 + $0xa8] sm:$0xff]
      %v2031 = vld [vmem:[#allocation9 + $0xb0] sm:$0xff]
      %v2032 = vld [vmem:[#allocation9 + $0xb8] sm:$0xff]
      %v2033 = vld [vmem:[#allocation9 + $0xc0] sm:$0xff]
      %v2034 = vld [vmem:[#allocation9 + $0xc8] sm:$0xff]
      %v2035 = vld [vmem:[#allocation9 + $0xd0] sm:$0xff]
      %v2036 = vld [vmem:[#allocation9 + $0xd8] sm:$0xff]
      %v2037 = vld [vmem:[#allocation9 + $0xe0] sm:$0xff]
      %v2038 = vld [vmem:[#allocation9 + $0xe8] sm:$0xff]
      %v2039 = vld [vmem:[#allocation9 + $0xf0] sm:$0xff]
      %v2040 = vld [vmem:[#allocation9 + $0xf8] sm:$0xff]
      %v2041 = vld [vmem:[#allocation9 + $0x100] sm:$0xff]
      %v2042 = vld [vmem:[#allocation9 + $0x108] sm:$0xff]
      %v2043 = vld [vmem:[#allocation9 + $0x110] sm:$0xff]
      %v2044 = vld [vmem:[#allocation9 + $0x118] sm:$0xff]
      %v2045 = vld [vmem:[#allocation9 + $0x120] sm:$0xff]
      %v2046 = vld [vmem:[#allocation9 + $0x128] sm:$0xff]
      %v2047 = vld [vmem:[#allocation9 + $0x130] sm:$0xff]
      %v2048 = vld [vmem:[#allocation9 + $0x138] sm:$0xff]
      %v2049 = vld [vmem:[#allocation9 + $0x140] sm:$0xff]
      %v2050 = vld [vmem:[#allocation9 + $0x148] sm:$0xff]
      %v2051 = vld [vmem:[#allocation9 + $0x150] sm:$0xff]
      %v2052 = vld [vmem:[#allocation9 + $0x158] sm:$0xff]
      %v2053 = vld [vmem:[#allocation9 + $0x160] sm:$0xff]
      %v2054 = vld [vmem:[#allocation9 + $0x168] sm:$0xff]
      %v2055 = vld [vmem:[#allocation9 + $0x170] sm:$0xff]
      %v2056 = vld [vmem:[#allocation9 + $0x178] sm:$0xff]
      %v2057 = vld [vmem:[#allocation9 + $0x180] sm:$0xff]
      %v2058 = vld [vmem:[#allocation9 + $0x188] sm:$0xff]
      %v2059 = vld [vmem:[#allocation9 + $0x190] sm:$0xff]
      %v2060 = vld [vmem:[#allocation9 + $0x198] sm:$0xff]
      %v2061 = vld [vmem:[#allocation9 + $0x1a0] sm:$0xff]
      %v2062 = vld [vmem:[#allocation9 + $0x1a8] sm:$0xff]
      %v2063 = vld [vmem:[#allocation9 + $0x1b0] sm:$0xff]
      %v2064 = vld [vmem:[#allocation9 + $0x1b8] sm:$0xff]
      %v2065 = vld [vmem:[#allocation9 + $0x1c0] sm:$0xff]
      %v2066 = vld [vmem:[#allocation9 + $0x1c8] sm:$0xff]
      %v2067 = vld [vmem:[#allocation9 + $0x1d0] sm:$0xff]
      %v2068 = vld [vmem:[#allocation9 + $0x1d8] sm:$0xff]
      %v2069 = vld [vmem:[#allocation9 + $0x1e0] sm:$0xff]
      %v2070 = vld [vmem:[#allocation9 + $0x1e8] sm:$0xff]
      %v2071 = vld [vmem:[#allocation9 + $0x1f0] sm:$0xff]
      %v2072 = vld [vmem:[#allocation2] sm:$0xff]
      %v2073 = vld [vmem:[#allocation2 + $0x8] sm:$0xff]
      %v2074 = vld [vmem:[#allocation2 + $0x10] sm:$0xff]
      %v2075 = vld [vmem:[#allocation2 + $0x18] sm:$0xff]
      %v2076 = vld [vmem:[#allocation2 + $0x20] sm:$0xff]
      %v2077 = vld [vmem:[#allocation2 + $0x28] sm:$0xff]
      %v2078 = vld [vmem:[#allocation2 + $0x30] sm:$0xff]
      %v2079 = vld [vmem:[#allocation2 + $0x38] sm:$0xff]
      %v2080 = vld [vmem:[#allocation2 + $0x40] sm:$0xff]
      %v2081 = vmul.f32 %v2072, 0.0012755102
      %v2082 = vmul.f32 %v2073, 0.0012755102
      %v2083 = vmul.f32 %v2074, 0.0012755102
      %v2084 = vmul.f32 %v2075, 0.0012755102
      %v2085 = vmul.f32 %v2076, 0.0012755102
      %v2086 = vmul.f32 %v2077, 0.0012755102
      %v2087 = vmul.f32 %v2078, 0.0012755102
      %v2088 = vmul.f32 %v2079, 0.0012755102
      %v2089 = vmul.f32 %v2080, 0.0012755102
      %v2090 = vmul.f32 %v2009, %v2009
      %v2091 = vmul.f32 %v2010, %v2010
      %v2092 = vmul.f32 %v2011, %v2011
      %v2093 = vmul.f32 %v2012, %v2012
      %v2094 = vmul.f32 %v2013, %v2013
      %v2095 = vmul.f32 %v2014, %v2014
      %v2096 = vmul.f32 %v2015, %v2015
      %v2097 = vmul.f32 %v2016, %v2016
      %v2098 = vmul.f32 %v2017, %v2017
      %v2099 = vmul.f32 %v2018, %v2018
      %v2100 = vmul.f32 %v2019, %v2019
      %v2101 = vmul.f32 %v2020, %v2020
      %v2102 = vmul.f32 %v2021, %v2021
      %v2103 = vmul.f32 %v2022, %v2022
      %v2104 = vmul.f32 %v2023, %v2023
      %v2105 = vmul.f32 %v2024, %v2024
      %v2106 = vmul.f32 %v2025, %v2025
      %v2107 = vmul.f32 %v2026, %v2026
      %v2108 = vmul.f32 %v2027, %v2027
      %v2109 = vmul.f32 %v2028, %v2028
      %v2110 = vmul.f32 %v2029, %v2029
      %v2111 = vmul.f32 %v2030, %v2030
      %v2112 = vmul.f32 %v2031, %v2031
      %v2113 = vmul.f32 %v2032, %v2032
      %v2114 = vmul.f32 %v2033, %v2033
      %v2115 = vmul.f32 %v2034, %v2034
      %v2116 = vmul.f32 %v2035, %v2035
      %v2117 = vmul.f32 %v2036, %v2036
      %v2118 = vmul.f32 %v2037, %v2037
      %v2119 = vmul.f32 %v2038, %v2038
      %v2120 = vmul.f32 %v2039, %v2039
      %v2121 = vmul.f32 %v2040, %v2040
      %v2122 = vmul.f32 %v2041, %v2041
      %v2123 = vmul.f32 %v2042, %v2042
      %v2124 = vmul.f32 %v2043, %v2043
      %v2125 = vmul.f32 %v2044, %v2044
      %v2126 = vmul.f32 %v2045, %v2045
      %v2127 = vmul.f32 %v2046, %v2046
      %v2128 = vmul.f32 %v2047, %v2047
      %v2129 = vmul.f32 %v2048, %v2048
      %v2130 = vmul.f32 %v2049, %v2049
      %v2131 = vmul.f32 %v2050, %v2050
      %v2132 = vmul.f32 %v2051, %v2051
      %v2133 = vmul.f32 %v2052, %v2052
      %v2134 = vmul.f32 %v2053, %v2053
      %v2135 = vmul.f32 %v2054, %v2054
      %v2136 = vmul.f32 %v2055, %v2055
      %v2137 = vmul.f32 %v2056, %v2056
      %v2138 = vmul.f32 %v2057, %v2057
      %v2139 = vmul.f32 %v2058, %v2058
      %v2140 = vmul.f32 %v2059, %v2059
      %v2141 = vmul.f32 %v2060, %v2060
      %v2142 = vmul.f32 %v2061, %v2061
      %v2143 = vmul.f32 %v2062, %v2062
      %v2144 = vmul.f32 %v2063, %v2063
      %v2145 = vmul.f32 %v2064, %v2064
      %v2146 = vmul.f32 %v2065, %v2065
      %v2147 = vmul.f32 %v2066, %v2066
      %v2148 = vmul.f32 %v2067, %v2067
      %v2149 = vmul.f32 %v2068, %v2068
      %v2150 = vmul.f32 %v2069, %v2069
      %v2151 = vmul.f32 %v2070, %v2070
      %v2152 = vmul.f32 %v2071, %v2071
      %v2153 = vadd.f32 %v2090, %v2091
      %v2154 = vadd.f32 %v2153, %v2092
      %v2155 = vadd.f32 %v2154, %v2093
      %v2156 = vadd.f32 %v2155, %v2094
      %v2157 = vadd.f32 %v2156, %v2095
      %v2158 = vsel %vm1631, %v2096, 0.0
      %v2159 = vadd.f32 %v2157, %v2158
      %2160 = vadd.xlane.f32.xlu0 %v2159
      %v2161 = vpop.xlane.xlu0 %2160
      %v2162 = vadd.f32 %v2097, %v2098
      %v2163 = vadd.f32 %v2162, %v2099
      %v2164 = vadd.f32 %v2163, %v2100
      %v2165 = vadd.f32 %v2164, %v2101
      %v2166 = vadd.f32 %v2165, %v2102
      %v2167 = vsel %vm1631, %v2103, 0.0
      %v2168 = vadd.f32 %v2166, %v2167
      %2169 = vadd.xlane.f32.xlu0 %v2168
      %v2170 = vpop.xlane.xlu0 %2169
      %v2171 = vadd.f32 %v2104, %v2105
      %v2172 = vadd.f32 %v2171, %v2106
      %v2173 = vadd.f32 %v2172, %v2107
      %v2174 = vadd.f32 %v2173, %v2108
      %v2175 = vadd.f32 %v2174, %v2109
      %v2176 = vsel %vm1631, %v2110, 0.0
      %v2177 = vadd.f32 %v2175, %v2176
      %2178 = vadd.xlane.f32.xlu0 %v2177
      %v2179 = vpop.xlane.xlu0 %2178
      %v2180 = vadd.f32 %v2111, %v2112
      %v2181 = vadd.f32 %v2180, %v2113
      %v2182 = vadd.f32 %v2181, %v2114
      %v2183 = vadd.f32 %v2182, %v2115
      %v2184 = vadd.f32 %v2183, %v2116
      %v2185 = vsel %vm1631, %v2117, 0.0
      %v2186 = vadd.f32 %v2184, %v2185
      %2187 = vadd.xlane.f32.xlu0 %v2186
      %v2188 = vpop.xlane.xlu0 %2187
      %v2189 = vadd.f32 %v2118, %v2119
      %v2190 = vadd.f32 %v2189, %v2120
      %v2191 = vadd.f32 %v2190, %v2121
      %v2192 = vadd.f32 %v2191, %v2122
      %v2193 = vadd.f32 %v2192, %v2123
      %v2194 = vsel %vm1631, %v2124, 0.0
      %v2195 = vadd.f32 %v2193, %v2194
      %2196 = vadd.xlane.f32.xlu0 %v2195
      %v2197 = vpop.xlane.xlu0 %2196
      %v2198 = vadd.f32 %v2125, %v2126
      %v2199 = vadd.f32 %v2198, %v2127
      %v2200 = vadd.f32 %v2199, %v2128
      %v2201 = vadd.f32 %v2200, %v2129
      %v2202 = vadd.f32 %v2201, %v2130
      %v2203 = vsel %vm1631, %v2131, 0.0
      %v2204 = vadd.f32 %v2202, %v2203
      %2205 = vadd.xlane.f32.xlu0 %v2204
      %v2206 = vpop.xlane.xlu0 %2205
      %v2207 = vadd.f32 %v2132, %v2133
      %v2208 = vadd.f32 %v2207, %v2134
      %v2209 = vadd.f32 %v2208, %v2135
      %v2210 = vadd.f32 %v2209, %v2136
      %v2211 = vadd.f32 %v2210, %v2137
      %v2212 = vsel %vm1631, %v2138, 0.0
      %v2213 = vadd.f32 %v2211, %v2212
      %2214 = vadd.xlane.f32.xlu0 %v2213
      %v2215 = vpop.xlane.xlu0 %2214
      %v2216 = vadd.f32 %v2139, %v2140
      %v2217 = vadd.f32 %v2216, %v2141
      %v2218 = vadd.f32 %v2217, %v2142
      %v2219 = vadd.f32 %v2218, %v2143
      %v2220 = vadd.f32 %v2219, %v2144
      %v2221 = vsel %vm1631, %v2145, 0.0
      %v2222 = vadd.f32 %v2220, %v2221
      %2223 = vadd.xlane.f32.xlu0 %v2222
      %v2224 = vpop.xlane.xlu0 %2223
      %v2225 = vadd.f32 %v2146, %v2147
      %v2226 = vadd.f32 %v2225, %v2148
      %v2227 = vadd.f32 %v2226, %v2149
      %v2228 = vadd.f32 %v2227, %v2150
      %v2229 = vadd.f32 %v2228, %v2151
      %v2230 = vsel %vm1631, %v2152, 0.0
      %v2231 = vadd.f32 %v2229, %v2230
      %2232 = vadd.xlane.f32.xlu0 %v2231
      %v2233 = vpop.xlane.xlu0 %2232
      %v2234 = vmul.f32 %v2161, 0.0012755102
      %v2235 = vmul.f32 %v2170, 0.0012755102
      %v2236 = vmul.f32 %v2179, 0.0012755102
      %v2237 = vmul.f32 %v2188, 0.0012755102
      %v2238 = vmul.f32 %v2197, 0.0012755102
      %v2239 = vmul.f32 %v2206, 0.0012755102
      %v2240 = vmul.f32 %v2215, 0.0012755102
      %v2241 = vmul.f32 %v2224, 0.0012755102
      %v2242 = vmul.f32 %v2233, 0.0012755102
      %v2243 = vmul.f32 %v2081, %v2081
      %v2244 = vmul.f32 %v2082, %v2082
      %v2245 = vmul.f32 %v2083, %v2083
      %v2246 = vmul.f32 %v2084, %v2084
      %v2247 = vmul.f32 %v2085, %v2085
      %v2248 = vmul.f32 %v2086, %v2086
      %v2249 = vmul.f32 %v2087, %v2087
      %v2250 = vmul.f32 %v2088, %v2088
      %v2251 = vmul.f32 %v2089, %v2089
      %v2252 = vsub.f32 %v2234, %v2243
      %v2253 = vsub.f32 %v2235, %v2244
      %v2254 = vsub.f32 %v2236, %v2245
      %v2255 = vsub.f32 %v2237, %v2246
      %v2256 = vsub.f32 %v2238, %v2247
      %v2257 = vsub.f32 %v2239, %v2248
      %v2258 = vsub.f32 %v2240, %v2249
      %v2259 = vsub.f32 %v2241, %v2250
      %v2260 = vsub.f32 %v2242, %v2251
      %v2261 = vld [vmem:[%s5] sm:$0xff]
      %v2262 = vld [vmem:[%s5 + $0x8] sm:$0xff]
      %v2263 = vld [vmem:[%s5 + $0x10] sm:$0xff]
      %v2264 = vld [vmem:[%s5 + $0x18] sm:$0xff]
      %v2265 = vld [vmem:[%s5 + $0x20] sm:$0xff]
      %v2266 = vld [vmem:[%s5 + $0x28] sm:$0xff]
      %v2267 = vld [vmem:[%s5 + $0x30] sm:$0xff]
      %v2268 = vld [vmem:[%s5 + $0x38] sm:$0xff]
      %v2269 = vld [vmem:[%s5 + $0x40] sm:$0xff]
      %v2270 = vadd.f32 %v2252, 0.001
      %v2271 = vadd.f32 %v2253, 0.001
      %v2272 = vadd.f32 %v2254, 0.001
      %v2273 = vadd.f32 %v2255, 0.001
      %v2274 = vadd.f32 %v2256, 0.001
      %v2275 = vadd.f32 %v2257, 0.001
      %v2276 = vadd.f32 %v2258, 0.001
      %v2277 = vadd.f32 %v2259, 0.001
      %v2278 = vadd.f32 %v2260, 0.001
      %v2279 = vrsqrt.pop %v2270
      %v2280 = vrsqrt.pop %v2271
      %v2281 = vrsqrt.pop %v2272
      %v2282 = vrsqrt.pop %v2273
      %v2283 = vrsqrt.pop %v2274
      %v2284 = vrsqrt.pop %v2275
      %v2285 = vrsqrt.pop %v2276
      %v2286 = vrsqrt.pop %v2277
      %v2287 = vrsqrt.pop %v2278
      %v2288 = vmul.f32 %v2261, %v2279
      %v2289 = vmul.f32 %v2262, %v2280
      %v2290 = vmul.f32 %v2263, %v2281
      %v2291 = vmul.f32 %v2264, %v2282
      %v2292 = vmul.f32 %v2265, %v2283
      %v2293 = vmul.f32 %v2266, %v2284
      %v2294 = vmul.f32 %v2267, %v2285
      %v2295 = vmul.f32 %v2268, %v2286
      %v2296 = vmul.f32 %v2269, %v2287
      %v2297 = vld [vmem:[%s6] sm:$0xff]
      %v2298 = vld [vmem:[%s6 + $0x8] sm:$0xff]
      %v2299 = vld [vmem:[%s6 + $0x10] sm:$0xff]
      %v2300 = vld [vmem:[%s6 + $0x18] sm:$0xff]
      %v2301 = vld [vmem:[%s6 + $0x20] sm:$0xff]
      %v2302 = vld [vmem:[%s6 + $0x28] sm:$0xff]
      %v2303 = vld [vmem:[%s6 + $0x30] sm:$0xff]
      %v2304 = vld [vmem:[%s6 + $0x38] sm:$0xff]
      %v2305 = vld [vmem:[%s6 + $0x40] sm:$0xff]
      %v2306 = vmul.f32 %v2288, %v2081
      %v2307 = vmul.f32 %v2289, %v2082
      %v2308 = vmul.f32 %v2290, %v2083
      %v2309 = vmul.f32 %v2291, %v2084
      %v2310 = vmul.f32 %v2292, %v2085
      %v2311 = vmul.f32 %v2293, %v2086
      %v2312 = vmul.f32 %v2294, %v2087
      %v2313 = vmul.f32 %v2295, %v2088
      %v2314 = vmul.f32 %v2296, %v2089
      %v2315 = vsub.f32 %v2297, %v2306
      %v2316 = vsub.f32 %v2298, %v2307
      %v2317 = vsub.f32 %v2299, %v2308
      %v2318 = vsub.f32 %v2300, %v2309
      %v2319 = vsub.f32 %v2301, %v2310
      %v2320 = vsub.f32 %v2302, %v2311
      %v2321 = vsub.f32 %v2303, %v2312
      %v2322 = vsub.f32 %v2304, %v2313
      %v2323 = vsub.f32 %v2305, %v2314
      %2325 = vset.pattern.permute.xlu0 0
      %2326 = vperm.xlu0 %2325, %v2288
      %v2327 = vpop.permute.xlu0 %2326
      %2330 = vset.pattern.permute.xlu0 0
      %2331 = vperm.xlu0 %2330, %v2289
      %v2332 = vpop.permute.xlu0 %2331
      %2335 = vset.pattern.permute.xlu0 0
      %2336 = vperm.xlu0 %2335, %v2290
      %v2337 = vpop.permute.xlu0 %2336
      %2340 = vset.pattern.permute.xlu0 0
      %2341 = vperm.xlu0 %2340, %v2291
      %v2342 = vpop.permute.xlu0 %2341
      %2345 = vset.pattern.permute.xlu0 0
      %2346 = vperm.xlu0 %2345, %v2292
      %v2347 = vpop.permute.xlu0 %2346
      %2350 = vset.pattern.permute.xlu0 0
      %2351 = vperm.xlu0 %2350, %v2293
      %v2352 = vpop.permute.xlu0 %2351
      %2355 = vset.pattern.permute.xlu0 0
      %2356 = vperm.xlu0 %2355, %v2294
      %v2357 = vpop.permute.xlu0 %2356
      %2360 = vset.pattern.permute.xlu0 0
      %2361 = vperm.xlu0 %2360, %v2295
      %v2362 = vpop.permute.xlu0 %2361
      %2365 = vset.pattern.permute.xlu0 0
      %2366 = vperm.xlu0 %2365, %v2296
      %v2367 = vpop.permute.xlu0 %2366
      %v2369 = vmul.f32 %v2009, %v2327
      %v2370 = vmul.f32 %v2010, %v2327
      %v2371 = vmul.f32 %v2011, %v2327
      %v2372 = vmul.f32 %v2012, %v2327
      %v2373 = vmul.f32 %v2013, %v2327
      %v2374 = vmul.f32 %v2014, %v2327
      %v2375 = vmul.f32 %v2015, %v2327
      %v2376 = vmul.f32 %v2016, %v2332
      %v2377 = vmul.f32 %v2017, %v2332
      %v2378 = vmul.f32 %v2018, %v2332
      %v2379 = vmul.f32 %v2019, %v2332
      %v2380 = vmul.f32 %v2020, %v2332
      %v2381 = vmul.f32 %v2021, %v2332
      %v2382 = vmul.f32 %v2022, %v2332
      %v2383 = vmul.f32 %v2023, %v2337
      %v2384 = vmul.f32 %v2024, %v2337
      %v2385 = vmul.f32 %v2025, %v2337
      %v2386 = vmul.f32 %v2026, %v2337
      %v2387 = vmul.f32 %v2027, %v2337
      %v2388 = vmul.f32 %v2028, %v2337
      %v2389 = vmul.f32 %v2029, %v2337
      %v2390 = vmul.f32 %v2030, %v2342
      %v2391 = vmul.f32 %v2031, %v2342
      %v2392 = vmul.f32 %v2032, %v2342
      %v2393 = vmul.f32 %v2033, %v2342
      %v2394 = vmul.f32 %v2034, %v2342
      %v2395 = vmul.f32 %v2035, %v2342
      %v2396 = vmul.f32 %v2036, %v2342
      %v2397 = vmul.f32 %v2037, %v2347
      %v2398 = vmul.f32 %v2038, %v2347
      %v2399 = vmul.f32 %v2039, %v2347
      %v2400 = vmul.f32 %v2040, %v2347
      %v2401 = vmul.f32 %v2041, %v2347
      %v2402 = vmul.f32 %v2042, %v2347
      %v2403 = vmul.f32 %v2043, %v2347
      %v2404 = vmul.f32 %v2044, %v2352
      %v2405 = vmul.f32 %v2045, %v2352
      %v2406 = vmul.f32 %v2046, %v2352
      %v2407 = vmul.f32 %v2047, %v2352
      %v2408 = vmul.f32 %v2048, %v2352
      %v2409 = vmul.f32 %v2049, %v2352
      %v2410 = vmul.f32 %v2050, %v2352
      %v2411 = vmul.f32 %v2051, %v2357
      %v2412 = vmul.f32 %v2052, %v2357
      %v2413 = vmul.f32 %v2053, %v2357
      %v2414 = vmul.f32 %v2054, %v2357
      %v2415 = vmul.f32 %v2055, %v2357
      %v2416 = vmul.f32 %v2056, %v2357
      %v2417 = vmul.f32 %v2057, %v2357
      %v2418 = vmul.f32 %v2058, %v2362
      %v2419 = vmul.f32 %v2059, %v2362
      %v2420 = vmul.f32 %v2060, %v2362
      %v2421 = vmul.f32 %v2061, %v2362
      %v2422 = vmul.f32 %v2062, %v2362
      %v2423 = vmul.f32 %v2063, %v2362
      %v2424 = vmul.f32 %v2064, %v2362
      %v2425 = vmul.f32 %v2065, %v2367
      %v2426 = vmul.f32 %v2066, %v2367
      %v2427 = vmul.f32 %v2067, %v2367
      %v2428 = vmul.f32 %v2068, %v2367
      %v2429 = vmul.f32 %v2069, %v2367
      %v2430 = vmul.f32 %v2070, %v2367
      %v2431 = vmul.f32 %v2071, %v2367
      %2433 = vset.pattern.permute.xlu0 0
      %2434 = vperm.xlu0 %2433, %v2315
      %v2435 = vpop.permute.xlu0 %2434
      %2438 = vset.pattern.permute.xlu0 0
      %2439 = vperm.xlu0 %2438, %v2316
      %v2440 = vpop.permute.xlu0 %2439
      %2443 = vset.pattern.permute.xlu0 0
      %2444 = vperm.xlu0 %2443, %v2317
      %v2445 = vpop.permute.xlu0 %2444
      %2448 = vset.pattern.permute.xlu0 0
      %2449 = vperm.xlu0 %2448, %v2318
      %v2450 = vpop.permute.xlu0 %2449
      %2453 = vset.pattern.permute.xlu0 0
      %2454 = vperm.xlu0 %2453, %v2319
      %v2455 = vpop.permute.xlu0 %2454
      %2458 = vset.pattern.permute.xlu0 0
      %2459 = vperm.xlu0 %2458, %v2320
      %v2460 = vpop.permute.xlu0 %2459
      %2463 = vset.pattern.permute.xlu0 0
      %2464 = vperm.xlu0 %2463, %v2321
      %v2465 = vpop.permute.xlu0 %2464
      %2468 = vset.pattern.permute.xlu0 0
      %2469 = vperm.xlu0 %2468, %v2322
      %v2470 = vpop.permute.xlu0 %2469
      %2473 = vset.pattern.permute.xlu0 0
      %2474 = vperm.xlu0 %2473, %v2323
      %v2475 = vpop.permute.xlu0 %2474
      %v2477 = vadd.f32 %v2369, %v2435
      %v2478 = vadd.f32 %v2370, %v2435
      %v2479 = vadd.f32 %v2371, %v2435
      %v2480 = vadd.f32 %v2372, %v2435
      %v2481 = vadd.f32 %v2373, %v2435
      %v2482 = vadd.f32 %v2374, %v2435
      %v2483 = vadd.f32 %v2375, %v2435
      %v2484 = vadd.f32 %v2376, %v2440
      %v2485 = vadd.f32 %v2377, %v2440
      %v2486 = vadd.f32 %v2378, %v2440
      %v2487 = vadd.f32 %v2379, %v2440
      %v2488 = vadd.f32 %v2380, %v2440
      %v2489 = vadd.f32 %v2381, %v2440
      %v2490 = vadd.f32 %v2382, %v2440
      %v2491 = vadd.f32 %v2383, %v2445
      %v2492 = vadd.f32 %v2384, %v2445
      %v2493 = vadd.f32 %v2385, %v2445
      %v2494 = vadd.f32 %v2386, %v2445
      %v2495 = vadd.f32 %v2387, %v2445
      %v2496 = vadd.f32 %v2388, %v2445
      %v2497 = vadd.f32 %v2389, %v2445
      %v2498 = vadd.f32 %v2390, %v2450
      %v2499 = vadd.f32 %v2391, %v2450
      %v2500 = vadd.f32 %v2392, %v2450
      %v2501 = vadd.f32 %v2393, %v2450
      %v2502 = vadd.f32 %v2394, %v2450
      %v2503 = vadd.f32 %v2395, %v2450
      %v2504 = vadd.f32 %v2396, %v2450
      %v2505 = vadd.f32 %v2397, %v2455
      %v2506 = vadd.f32 %v2398, %v2455
      %v2507 = vadd.f32 %v2399, %v2455
      %v2508 = vadd.f32 %v2400, %v2455
      %v2509 = vadd.f32 %v2401, %v2455
      %v2510 = vadd.f32 %v2402, %v2455
      %v2511 = vadd.f32 %v2403, %v2455
      %v2512 = vadd.f32 %v2404, %v2460
      %v2513 = vadd.f32 %v2405, %v2460
      %v2514 = vadd.f32 %v2406, %v2460
      %v2515 = vadd.f32 %v2407, %v2460
      %v2516 = vadd.f32 %v2408, %v2460
      %v2517 = vadd.f32 %v2409, %v2460
      %v2518 = vadd.f32 %v2410, %v2460
      %v2519 = vadd.f32 %v2411, %v2465
      %v2520 = vadd.f32 %v2412, %v2465
      %v2521 = vadd.f32 %v2413, %v2465
      %v2522 = vadd.f32 %v2414, %v2465
      %v2523 = vadd.f32 %v2415, %v2465
      %v2524 = vadd.f32 %v2416, %v2465
      %v2525 = vadd.f32 %v2417, %v2465
      %v2526 = vadd.f32 %v2418, %v2470
      %v2527 = vadd.f32 %v2419, %v2470
      %v2528 = vadd.f32 %v2420, %v2470
      %v2529 = vadd.f32 %v2421, %v2470
      %v2530 = vadd.f32 %v2422, %v2470
      %v2531 = vadd.f32 %v2423, %v2470
      %v2532 = vadd.f32 %v2424, %v2470
      %v2533 = vadd.f32 %v2425, %v2475
      %v2534 = vadd.f32 %v2426, %v2475
      %v2535 = vadd.f32 %v2427, %v2475
      %v2536 = vadd.f32 %v2428, %v2475
      %v2537 = vadd.f32 %v2429, %v2475
      %v2538 = vadd.f32 %v2430, %v2475
      %v2539 = vadd.f32 %v2431, %v2475
      %2540 = vst [vmem:[#allocation9] sm:$0xff] %v2477
      %2541 = vst [vmem:[#allocation9 + $0x8] sm:$0xff] %v2478
      %2542 = vst [vmem:[#allocation9 + $0x10] sm:$0xff] %v2479
      %2543 = vst [vmem:[#allocation9 + $0x18] sm:$0xff] %v2480
      %2544 = vst [vmem:[#allocation9 + $0x20] sm:$0xff] %v2481
      %2545 = vst [vmem:[#allocation9 + $0x28] sm:$0xff] %v2482
      %2546 = vst.msk [vmem:[#allocation9 + $0x30] sm:$0xff] %vm1631, %v2483
      %2547 = vst [vmem:[#allocation9 + $0x38] sm:$0xff] %v2484
      %2548 = vst [vmem:[#allocation9 + $0x40] sm:$0xff] %v2485
      %2549 = vst [vmem:[#allocation9 + $0x48] sm:$0xff] %v2486
      %2550 = vst [vmem:[#allocation9 + $0x50] sm:$0xff] %v2487
      %2551 = vst [vmem:[#allocation9 + $0x58] sm:$0xff] %v2488
      %2552 = vst [vmem:[#allocation9 + $0x60] sm:$0xff] %v2489
      %2553 = vst.msk [vmem:[#allocation9 + $0x68] sm:$0xff] %vm1631, %v2490
      %2554 = vst [vmem:[#allocation9 + $0x70] sm:$0xff] %v2491
      %2555 = vst [vmem:[#allocation9 + $0x78] sm:$0xff] %v2492
      %2556 = vst [vmem:[#allocation9 + $0x80] sm:$0xff] %v2493
      %2557 = vst [vmem:[#allocation9 + $0x88] sm:$0xff] %v2494
      %2558 = vst [vmem:[#allocation9 + $0x90] sm:$0xff] %v2495
      %2559 = vst [vmem:[#allocation9 + $0x98] sm:$0xff] %v2496
      %2560 = vst.msk [vmem:[#allocation9 + $0xa0] sm:$0xff] %vm1631, %v2497
      %2561 = vst [vmem:[#allocation9 + $0xa8] sm:$0xff] %v2498
      %2562 = vst [vmem:[#allocation9 + $0xb0] sm:$0xff] %v2499
      %2563 = vst [vmem:[#allocation9 + $0xb8] sm:$0xff] %v2500
      %2564 = vst [vmem:[#allocation9 + $0xc0] sm:$0xff] %v2501
      %2565 = vst [vmem:[#allocation9 + $0xc8] sm:$0xff] %v2502
      %2566 = vst [vmem:[#allocation9 + $0xd0] sm:$0xff] %v2503
      %2567 = vst.msk [vmem:[#allocation9 + $0xd8] sm:$0xff] %vm1631, %v2504
      %2568 = vst [vmem:[#allocation9 + $0xe0] sm:$0xff] %v2505
      %2569 = vst [vmem:[#allocation9 + $0xe8] sm:$0xff] %v2506
      %2570 = vst [vmem:[#allocation9 + $0xf0] sm:$0xff] %v2507
      %2571 = vst [vmem:[#allocation9 + $0xf8] sm:$0xff] %v2508
      %2572 = vst [vmem:[#allocation9 + $0x100] sm:$0xff] %v2509
      %2573 = vst [vmem:[#allocation9 + $0x108] sm:$0xff] %v2510
      %2574 = vst.msk [vmem:[#allocation9 + $0x110] sm:$0xff] %vm1631, %v2511
      %2575 = vst [vmem:[#allocation9 + $0x118] sm:$0xff] %v2512
      %2576 = vst [vmem:[#allocation9 + $0x120] sm:$0xff] %v2513
      %2577 = vst [vmem:[#allocation9 + $0x128] sm:$0xff] %v2514
      %2578 = vst [vmem:[#allocation9 + $0x130] sm:$0xff] %v2515
      %2579 = vst [vmem:[#allocation9 + $0x138] sm:$0xff] %v2516
      %2580 = vst [vmem:[#allocation9 + $0x140] sm:$0xff] %v2517
      %2581 = vst.msk [vmem:[#allocation9 + $0x148] sm:$0xff] %vm1631, %v2518
      %2582 = vst [vmem:[#allocation9 + $0x150] sm:$0xff] %v2519
      %2583 = vst [vmem:[#allocation9 + $0x158] sm:$0xff] %v2520
      %2584 = vst [vmem:[#allocation9 + $0x160] sm:$0xff] %v2521
      %2585 = vst [vmem:[#allocation9 + $0x168] sm:$0xff] %v2522
      %2586 = vst [vmem:[#allocation9 + $0x170] sm:$0xff] %v2523
      %2587 = vst [vmem:[#allocation9 + $0x178] sm:$0xff] %v2524
      %2588 = vst.msk [vmem:[#allocation9 + $0x180] sm:$0xff] %vm1631, %v2525
      %2589 = vst [vmem:[#allocation9 + $0x188] sm:$0xff] %v2526
      %2590 = vst [vmem:[#allocation9 + $0x190] sm:$0xff] %v2527
      %2591 = vst [vmem:[#allocation9 + $0x198] sm:$0xff] %v2528
      %2592 = vst [vmem:[#allocation9 + $0x1a0] sm:$0xff] %v2529
      %2593 = vst [vmem:[#allocation9 + $0x1a8] sm:$0xff] %v2530
      %2594 = vst [vmem:[#allocation9 + $0x1b0] sm:$0xff] %v2531
      %2595 = vst.msk [vmem:[#allocation9 + $0x1b8] sm:$0xff] %vm1631, %v2532
      %2596 = vst [vmem:[#allocation9 + $0x1c0] sm:$0xff] %v2533
      %2597 = vst [vmem:[#allocation9 + $0x1c8] sm:$0xff] %v2534
      %2598 = vst [vmem:[#allocation9 + $0x1d0] sm:$0xff] %v2535
      %2599 = vst [vmem:[#allocation9 + $0x1d8] sm:$0xff] %v2536
      %2600 = vst [vmem:[#allocation9 + $0x1e0] sm:$0xff] %v2537
      %2601 = vst [vmem:[#allocation9 + $0x1e8] sm:$0xff] %v2538
      %2602 = vst.msk [vmem:[#allocation9 + $0x1f0] sm:$0xff] %vm1631, %v2539
    $region53: #{tpu_custom_call.1} parent=1 // pred_fallthru
      _
    // Predicated region
    $region54: #{tpu_custom_call.1} parent=1 // pred_check
      _
    $region55: #{tpu_custom_call.1} parent=1 // pred_check_branch
      %2604 = sbr.rel (0) target = $region57
    $region56: #{tpu_custom_call.1} parent=1 // pred_region
      %s2606 = ssub.s32 8064, 8064
      %2607 = vsyncadd [#allocation5], %s2606
      %s2608 = sshll.u32 [#allocation9], 4
      %s2609 = int_to_ptr.vmem [resolvable:$true] %s2608
      %2614 = dma.vmem_to_hbm [thread:$0]  %s2609, 8064, %s7, [#allocation5], 896, 896, 56
    $region57: #{tpu_custom_call.1} parent=1 // pred_fallthru
      _
    // Predicated region
    $region58: #{tpu_custom_call.1} parent=1 // pred_check
      _
    $region59: #{tpu_custom_call.1} parent=1 // pred_check_branch
      %2616 = sbr.rel (0) target = $region61
    $region60: #{tpu_custom_call.1} parent=1 // pred_region
      %2617 = dma.done [#allocation5], 8064
    $region61: #{tpu_custom_call.1} parent=1 // pred_fallthru
      _
    %2618 = vsyncpa [#allocation4], 1
    %2619 = vsyncpa [#allocation7], 1
    %2620 = vsyncpa [#allocation5], 1

</llo_original>
